<compile_context>
chip_gen: v7x
topology: tpu7x:2x2x1
jax: 0.10.0
libtpu: 0.0.40
codegen_flags: <defaults>
</compile_context>

<pallas_src>
import math
from functools import partial

import jax
import jax.numpy as jnp
from jax import lax
from jax.experimental import pallas as pl
from jax.experimental.pallas import tpu as pltpu

BN_EPS = 2e-5
NORM_EPS = 1e-12
H1, H2 = 1024, 128
_LOG_EPS6 = math.log(1e-6)  # for the stable softplus-style logvar epilogue


def _batchnorm_train(h, eps=BN_EPS):
    # PyTorch BatchNorm1d (training): biased batch variance, affine w=1, b=0.
    # One pass over the batch (sublane) axis: sum and sum-of-squares.
    inv_n = 1.0 / h.shape[0]
    s = jnp.sum(h, axis=0, keepdims=True)
    ss = jnp.sum(h * h, axis=0, keepdims=True)
    mean = s * inv_n
    # Clamp: one-pass variance (E[x^2]-mean^2) can go slightly negative in f32.
    var = jnp.maximum(ss * inv_n - mean * mean, 0.0)
    return (h - mean) * lax.rsqrt(var + eps)


def _get_mu_logvar_kernel(gb_ref, x_ref, w1_ref, w2_ref, out_ref, h_acc_ref):
    # grid=(2, nk): axis 0 = branch (0: mu, 1: logvar), axis 1 = F reduction.
    branch = pl.program_id(0)
    k = pl.program_id(1)

    @pl.when(k == 0)
    def _init():
        h_acc_ref[...] = jnp.zeros_like(h_acc_ref)

    # First (large) layer, F-tiled: bf16 weight streaming, f32 MXU accumulation.
    # Linear bias omitted on purpose: BatchNorm mean-subtraction cancels it.
    h_acc_ref[...] += jnp.dot(x_ref[...], w1_ref[...],
                              preferred_element_type=jnp.float32)

    @pl.when(k == pl.num_programs(1) - 1)
    def _epilogue():
        h = jnp.maximum(_batchnorm_train(h_acc_ref[...]), 0.0)        # BN + ReLU

        # Second (small) layer: bf16 weights, f32 accumulation.
        v = jnp.dot(h.astype(jnp.bfloat16), w2_ref[...],
                    preferred_element_type=jnp.float32)
        v = _batchnorm_train(v)

        @pl.when(branch == 0)
        def _mu():
            # F.normalize(dim=1): x / max(||x||, 1e-12)
            sumsq = jnp.sum(v * v, axis=1, keepdims=True)
            out_ref[...] = (
                v * lax.rsqrt(jnp.maximum(sumsq, NORM_EPS * NORM_EPS))
            ).astype(out_ref.dtype)

        @pl.when(branch == 1)
        def _logvar():
            gamma = gb_ref[0]                                          # SMEM scalars
            beta = gb_ref[1]
            lv = gamma * v + beta
            # log(1e-6 + exp(lv)) == logaddexp(log(1e-6), lv), overflow-safe.
            m = jnp.maximum(lv, _LOG_EPS6)
            out_ref[...] = (
                m + jnp.log(1.0 + jnp.exp(-jnp.abs(lv - _LOG_EPS6)))
            ).astype(out_ref.dtype)


def _pick_tk(F, max_tk):
    # Largest F-tile <= max_tk that evenly divides F (keeps tiles >= ~2-4 MiB
    # of bf16 w1 so the ~0.35 us/step pipeline overhead stays negligible).
    if F <= max_tk:
        return F
    for tk in (2048, 1024, 512, 256, 128):
        if tk <= max_tk and F % tk == 0:
            return tk
    return F  # fallback: no tiling


@partial(jax.jit, static_argnames=("max_tk",))
def get_mu_logvar(x, params, *, max_tk=2048):
    B, F = x.shape
    tk = _pick_tk(F, max_tk)
    nk = F // tk
    x16 = x.astype(jnp.bfloat16)   # cast once in the wrapper, halves x HBM bytes

    out = pl.pallas_call(
        _get_mu_logvar_kernel,
        out_shape=jax.ShapeDtypeStruct((2, B, H2), jnp.float32),
        grid=(2, nk),
        in_specs=[
            # gamma/beta: scalar path, no padded VMEM tile.
            pl.BlockSpec(memory_space=pltpu.MemorySpace.SMEM),
            # x: (B, tk) tile of the feature axis.
            pl.BlockSpec((B, tk), lambda b, k: (0, k)),
            # per-branch, F-tiled first-layer weight (bf16 stream).
            pl.BlockSpec((None, tk, H1), lambda b, k: (b, k, 0)),
            # per-branch second-layer weight (bf16), resident across k.
            pl.BlockSpec((None, H1, H2), lambda b, k: (b, 0, 0)),
        ],
        out_specs=pl.BlockSpec((None, B, H2), lambda b, k: (b, 0, 0)),
        scratch_shapes=[pltpu.VMEM((B, H1), jnp.float32)],
        # Branch axis independent -> split across the 2 TensorCores on v7x;
        # the F axis is a sequential reduction.
        compiler_params=pltpu.CompilerParams(
            dimension_semantics=("parallel", "arbitrary")),
    )(params["gb"], x16, params["w1"], params["w2"])
    return out[0], out[1]


def init_params(key, feature_size):
    ks = jax.random.split(key, 8)

    def lin(kw, kb, fan_in, fan_out):
        # PyTorch Linear default init: U(-1/sqrt(fan_in), 1/sqrt(fan_in))
        bound = 1.0 / jnp.sqrt(fan_in)
        w = jax.random.uniform(kw, (fan_in, fan_out), jnp.float32, -bound, bound)
        b = jax.random.uniform(kb, (1, fan_out), jnp.float32, -bound, bound)
        return w, b

    w_mu1, b_mu1 = lin(ks[0], ks[1], feature_size, H1)
    w_mu2, b_mu2 = lin(ks[2], ks[3], H1, H2)
    w_v1, b_v1 = lin(ks[4], ks[5], feature_size, H1)
    w_v2, b_v2 = lin(ks[6], ks[7], H1, H2)
    return {
        # Kernel params: stacked per branch (index 0 = mu, index 1 = logvar).
        "w1": jnp.stack([w_mu1, w_v1]).astype(jnp.bfloat16),   # big -> bf16 stream
        "w2": jnp.stack([w_mu2, w_v2]).astype(jnp.bfloat16),   # small -> bf16 stream
        "gb": jnp.array([1e-4, -7.0], jnp.float32),            # [gamma, beta]
        # Reference-only biases (exactly cancelled by the following BatchNorm).
        "b_mu1": b_mu1, "b_mu2": b_mu2, "b_v1": b_v1, "b_v2": b_v2,
    }


def _reference(x, p):
    # Pure f32 JAX reference with PyTorch semantics (including Linear biases).
    def bn(h):
        mean = jnp.mean(h, axis=0, keepdims=True)
        var = jnp.mean((h - mean) ** 2, axis=0, keepdims=True)
        return (h - mean) / jnp.sqrt(var + BN_EPS)

    w_mu1 = p["w1"][0].astype(jnp.float32)
    w_v1 = p["w1"][1].astype(jnp.float32)
    w_mu2 = p["w2"][0].astype(jnp.float32)
    w_v2 = p["w2"][1].astype(jnp.float32)
    gamma, beta = p["gb"][0], p["gb"][1]

    h = jnp.maximum(bn(x @ w_mu1 + p["b_mu1"]), 0.0)
    m = bn(h @ w_mu2 + p["b_mu2"])
    mu = m / jnp.maximum(jnp.linalg.norm(m, axis=1, keepdims=True), NORM_EPS)

    g = jnp.maximum(bn(x @ w_v1 + p["b_v1"]), 0.0)
    v = bn(g @ w_v2 + p["b_v2"])
    lv = jnp.log(1e-6 + jnp.exp(gamma * v + beta))
    return mu, lv


if __name__ == "__main__":
    feature_size = 256   # module default is 4096; kept small for the test
    batch = 8
    key = jax.random.PRNGKey(0)
    kx, kp = jax.random.split(key)
    x = jax.random.normal(kx, (batch, feature_size), jnp.float32)
    params = init_params(kp, feature_size)

    mu_ref, lv_ref = _reference(x, params)

    # 1) Default path: single F tile (nk == 1).
    mu, logvar = get_mu_logvar(x, params)
    jax.block_until_ready((mu, logvar))
    assert mu.shape == (batch, 128) and logvar.shape == (batch, 128)
    assert jnp.allclose(mu, mu_ref, atol=2e-2, rtol=2e-2)
    assert jnp.allclose(logvar, lv_ref, atol=2e-2, rtol=2e-2)

    # 2) Exercise the F-tiled reduction path (nk == 2) used for large F.
    mu2, logvar2 = get_mu_logvar(x, params, max_tk=128)
    jax.block_until_ready((mu2, logvar2))
    assert jnp.allclose(mu2, mu_ref, atol=2e-2, rtol=2e-2)
    assert jnp.allclose(logvar2, lv_ref, atol=2e-2, rtol=2e-2)

    print("KERNEL_OK")
</pallas_src>

<mosaic_0001>
module attributes {stable_mosaic.version = 11 : i64} {
  func.func @_get_mu_logvar_kernel(%arg0: i32, %arg1: i32, %arg2: memref<2xf32, #tpu.memory_space<smem>>, %arg3: memref<8x256xbf16, #tpu.memory_space<vmem>>, %arg4: memref<1x256x1024xbf16, #tpu.memory_space<vmem>>, %arg5: memref<1x1024x128xbf16, #tpu.memory_space<vmem>>, %arg6: memref<1x8x128xf32, #tpu.memory_space<vmem>>, %arg7: memref<8x1024xf32, #tpu.memory_space<vmem>>) attributes {dimension_semantics = [#tpu.dimension_semantics<parallel>, #tpu.dimension_semantics<arbitrary>], iteration_bounds = array<i64: 2, 1>, scalar_prefetch = 0 : i64, scratch_operands = 1 : i64, tpu.core_type = #tpu.core_type<tc>, window_params = [{transform_indices = @transform_0, window_bounds = array<i64: 2>}, {transform_indices = @transform_1, window_bounds = array<i64: 8, 256>}, {transform_indices = @transform_2, window_bounds = array<i64: 1, 256, 1024>}, {transform_indices = @transform_3, window_bounds = array<i64: 1, 1024, 128>}, {transform_indices = @transform_4, window_bounds = array<i64: 1, 8, 128>}]} {
    %c0_i32 = arith.constant 0 : i32
    %0 = arith.cmpi eq, %arg1, %c0_i32 : i32
    %1 = arith.extui %0 : i1 to i32
    %c0_i32_0 = arith.constant 0 : i32
    %2 = arith.cmpi ne, %1, %c0_i32_0 : i32
    scf.if %2 {
      %cst_11 = arith.constant 0.000000e+00 : f32
      %13 = vector.broadcast %cst_11 : f32 to vector<8x1024xf32>
      %c0_12 = arith.constant 0 : index
      %c0_13 = arith.constant 0 : index
      %14 = vector.load %arg7[%c0_12, %c0_13] : memref<8x1024xf32, #tpu.memory_space<vmem>>, vector<8x1024xf32>
      tpu.vector_store %arg7[%c0_12, %c0_13], %13 {strides = array<i32>} : memref<8x1024xf32, #tpu.memory_space<vmem>>, vector<8x1024xf32>,
    } else {
    }
    %c0 = arith.constant 0 : index
    %c0_1 = arith.constant 0 : index
    %3 = vector.load %arg7[%c0, %c0_1] : memref<8x1024xf32, #tpu.memory_space<vmem>>, vector<8x1024xf32>
    %c0_2 = arith.constant 0 : index
    %c0_3 = arith.constant 0 : index
    %4 = vector.load %arg3[%c0_2, %c0_3] : memref<8x256xbf16, #tpu.memory_space<vmem>>, vector<8x256xbf16>
    %c0_4 = arith.constant 0 : index
    %c0_5 = arith.constant 0 : index
    %c0_6 = arith.constant 0 : index
    %5 = vector.load %arg4[%c0_4, %c0_5, %c0_6] : memref<1x256x1024xbf16, #tpu.memory_space<vmem>>, vector<1x256x1024xbf16>
    %6 = vector.shape_cast %5 : vector<1x256x1024xbf16> to vector<256x1024xbf16>
    %cst = arith.constant dense<0.000000e+00> : vector<8x1024xf32>
    %7 = tpu.matmul %4, %6, %cst {dimension_numbers = #tpu.dot_dimension_numbers<[1], [0], [0], [1], [0, 0, 1, 1], [], []>} : vector<8x256xbf16>, vector<256x1024xbf16>, vector<8x1024xf32> -> vector<8x1024xf32>
    %8 = arith.addf %3, %7 : vector<8x1024xf32>
    %c0_7 = arith.constant 0 : index
    %c0_8 = arith.constant 0 : index
    %9 = vector.load %arg7[%c0_7, %c0_8] : memref<8x1024xf32, #tpu.memory_space<vmem>>, vector<8x1024xf32>
    tpu.vector_store %arg7[%c0_7, %c0_8], %8 {strides = array<i32>} : memref<8x1024xf32, #tpu.memory_space<vmem>>, vector<8x1024xf32>,
    %c0_i32_9 = arith.constant 0 : i32
    %10 = arith.cmpi eq, %arg1, %c0_i32_9 : i32
    %11 = arith.extui %10 : i1 to i32
    %c0_i32_10 = arith.constant 0 : i32
    %12 = arith.cmpi ne, %11, %c0_i32_10 : i32
    scf.if %12 {
      %c0_11 = arith.constant 0 : index
      %c0_12 = arith.constant 0 : index
      %13 = vector.load %arg7[%c0_11, %c0_12] : memref<8x1024xf32, #tpu.memory_space<vmem>>, vector<8x1024xf32>
      %cst_13 = arith.constant dense<0.000000e+00> : vector<1024xf32>
      %14 = vector.multi_reduction <add>, %13, %cst_13 [0] : vector<8x1024xf32> to vector<1024xf32>
      %15 = vector.shape_cast %14 : vector<1024xf32> to vector<1x1024xf32>
      %16 = arith.mulf %13, %13 : vector<8x1024xf32>
      %cst_14 = arith.constant dense<0.000000e+00> : vector<1024xf32>
      %17 = vector.multi_reduction <add>, %16, %cst_14 [0] : vector<8x1024xf32> to vector<1024xf32>
      %18 = vector.shape_cast %17 : vector<1024xf32> to vector<1x1024xf32>
      %cst_15 = arith.constant 1.250000e-01 : f32
      %19 = vector.broadcast %cst_15 : f32 to vector<1x1024xf32>
      %20 = arith.mulf %15, %19 : vector<1x1024xf32>
      %cst_16 = arith.constant 1.250000e-01 : f32
      %21 = vector.broadcast %cst_16 : f32 to vector<1x1024xf32>
      %22 = arith.mulf %18, %21 : vector<1x1024xf32>
      %23 = arith.mulf %20, %20 : vector<1x1024xf32>
      %24 = arith.subf %22, %23 : vector<1x1024xf32>
      %cst_17 = arith.constant 0.000000e+00 : f32
      %25 = vector.broadcast %cst_17 : f32 to vector<1x1024xf32>
      %26 = arith.maximumf %24, %25 : vector<1x1024xf32>
      %27 = vector.broadcast %20 : vector<1x1024xf32> to vector<8x1024xf32>
      %28 = arith.subf %13, %27 : vector<8x1024xf32>
      %cst_18 = arith.constant 2.000000e-05 : f32
      %29 = vector.broadcast %cst_18 : f32 to vector<1x1024xf32>
      %30 = arith.addf %26, %29 : vector<1x1024xf32>
      %31 = math.rsqrt %30 : vector<1x1024xf32>
      %32 = vector.broadcast %31 : vector<1x1024xf32> to vector<8x1024xf32>
      %33 = arith.mulf %28, %32 : vector<8x1024xf32>
      %cst_19 = arith.constant 0.000000e+00 : f32
      %34 = vector.broadcast %cst_19 : f32 to vector<8x1024xf32>
      %35 = arith.maximumf %33, %34 : vector<8x1024xf32>
      %36 = arith.truncf %35 : vector<8x1024xf32> to vector<8x1024xbf16>
      %c0_20 = arith.constant 0 : index
      %c0_21 = arith.constant 0 : index
      %c0_22 = arith.constant 0 : index
      %37 = vector.load %arg5[%c0_20, %c0_21, %c0_22] : memref<1x1024x128xbf16, #tpu.memory_space<vmem>>, vector<1x1024x128xbf16>
      %38 = vector.shape_cast %37 : vector<1x1024x128xbf16> to vector<1024x128xbf16>
      %cst_23 = arith.constant dense<0.000000e+00> : vector<8x128xf32>
      %39 = tpu.matmul %36, %38, %cst_23 {dimension_numbers = #tpu.dot_dimension_numbers<[1], [0], [0], [1], [0, 0, 1, 1], [], []>} : vector<8x1024xbf16>, vector<1024x128xbf16>, vector<8x128xf32> -> vector<8x128xf32>
      %cst_24 = arith.constant dense<0.000000e+00> : vector<128xf32>
      %40 = vector.multi_reduction <add>, %39, %cst_24 [0] : vector<8x128xf32> to vector<128xf32>
      %41 = vector.shape_cast %40 : vector<128xf32> to vector<1x128xf32>
      %42 = arith.mulf %39, %39 : vector<8x128xf32>
      %cst_25 = arith.constant dense<0.000000e+00> : vector<128xf32>
      %43 = vector.multi_reduction <add>, %42, %cst_25 [0] : vector<8x128xf32> to vector<128xf32>
      %44 = vector.shape_cast %43 : vector<128xf32> to vector<1x128xf32>
      %cst_26 = arith.constant 1.250000e-01 : f32
      %45 = vector.broadcast %cst_26 : f32 to vector<1x128xf32>
      %46 = arith.mulf %41, %45 : vector<1x128xf32>
      %cst_27 = arith.constant 1.250000e-01 : f32
      %47 = vector.broadcast %cst_27 : f32 to vector<1x128xf32>
      %48 = arith.mulf %44, %47 : vector<1x128xf32>
      %49 = arith.mulf %46, %46 : vector<1x128xf32>
      %50 = arith.subf %48, %49 : vector<1x128xf32>
      %cst_28 = arith.constant 0.000000e+00 : f32
      %51 = vector.broadcast %cst_28 : f32 to vector<1x128xf32>
      %52 = arith.maximumf %50, %51 : vector<1x128xf32>
      %53 = vector.broadcast %46 : vector<1x128xf32> to vector<8x128xf32>
      %54 = arith.subf %39, %53 : vector<8x128xf32>
      %cst_29 = arith.constant 2.000000e-05 : f32
      %55 = vector.broadcast %cst_29 : f32 to vector<1x128xf32>
      %56 = arith.addf %52, %55 : vector<1x128xf32>
      %57 = math.rsqrt %56 : vector<1x128xf32>
      %58 = vector.broadcast %57 : vector<1x128xf32> to vector<8x128xf32>
      %59 = arith.mulf %54, %58 : vector<8x128xf32>
      %c0_i32_30 = arith.constant 0 : i32
      %60 = arith.cmpi eq, %arg0, %c0_i32_30 : i32
      %61 = arith.extui %60 : i1 to i32
      %c0_i32_31 = arith.constant 0 : i32
      %62 = arith.cmpi ne, %61, %c0_i32_31 : i32
      scf.if %62 {
        %66 = arith.mulf %59, %59 : vector<8x128xf32>
        %cst_33 = arith.constant dense<0.000000e+00> : vector<8xf32>
        %67 = vector.multi_reduction <add>, %66, %cst_33 [1] : vector<8x128xf32> to vector<8xf32>
        %68 = vector.shape_cast %67 : vector<8xf32> to vector<8x1xf32>
        %cst_34 = arith.constant 1.000000e-24 : f32
        %69 = vector.broadcast %cst_34 : f32 to vector<8x1xf32>
        %70 = arith.maximumf %68, %69 : vector<8x1xf32>
        %71 = math.rsqrt %70 : vector<8x1xf32>
        %72 = vector.broadcast %71 : vector<8x1xf32> to vector<8x128xf32>
        %73 = arith.mulf %59, %72 : vector<8x128xf32>
        %c0_35 = arith.constant 0 : index
        %c0_36 = arith.constant 0 : index
        %c0_37 = arith.constant 0 : index
        %74 = vector.load %arg6[%c0_35, %c0_36, %c0_37] : memref<1x8x128xf32, #tpu.memory_space<vmem>>, vector<1x8x128xf32>
        %75 = vector.shape_cast %74 : vector<1x8x128xf32> to vector<8x128xf32>
        %76 = vector.shape_cast %73 : vector<8x128xf32> to vector<1x8x128xf32>
        tpu.vector_store %arg6[%c0_35, %c0_36, %c0_37], %76 {strides = array<i32>} : memref<1x8x128xf32, #tpu.memory_space<vmem>>, vector<1x8x128xf32>,
      } else {
      }
      %c1_i32 = arith.constant 1 : i32
      %63 = arith.cmpi eq, %arg0, %c1_i32 : i32
      %64 = arith.extui %63 : i1 to i32
      %c0_i32_32 = arith.constant 0 : i32
      %65 = arith.cmpi ne, %64, %c0_i32_32 : i32
      scf.if %65 {
        %c0_33 = arith.constant 0 : index
        %66 = memref.load %arg2[%c0_33] : memref<2xf32, #tpu.memory_space<smem>>
        %c1 = arith.constant 1 : index
        %67 = memref.load %arg2[%c1] : memref<2xf32, #tpu.memory_space<smem>>
        %68 = vector.broadcast %66 : f32 to vector<8x128xf32>
        %69 = arith.mulf %68, %59 : vector<8x128xf32>
        %70 = vector.broadcast %67 : f32 to vector<8x128xf32>
        %71 = arith.addf %69, %70 : vector<8x128xf32>
        %cst_34 = arith.constant -13.8155107 : f32
        %72 = vector.broadcast %cst_34 : f32 to vector<8x128xf32>
        %73 = arith.maximumf %71, %72 : vector<8x128xf32>
        %cst_35 = arith.constant -13.8155107 : f32
        %74 = vector.broadcast %cst_35 : f32 to vector<8x128xf32>
        %75 = arith.subf %71, %74 : vector<8x128xf32>
        %76 = math.absf %75 : vector<8x128xf32>
        %cst_36 = arith.constant 0.000000e+00 : f32
        %77 = vector.broadcast %cst_36 : f32 to vector<8x128xf32>
        %78 = arith.subf %77, %76 : vector<8x128xf32>
        %79 = math.exp %78 : vector<8x128xf32>
        %cst_37 = arith.constant 1.000000e+00 : f32
        %80 = vector.broadcast %cst_37 : f32 to vector<8x128xf32>
        %81 = arith.addf %80, %79 : vector<8x128xf32>
        %82 = math.log %81 : vector<8x128xf32>
        %83 = arith.addf %73, %82 : vector<8x128xf32>
        %c0_38 = arith.constant 0 : index
        %c0_39 = arith.constant 0 : index
        %c0_40 = arith.constant 0 : index
        %84 = vector.load %arg6[%c0_38, %c0_39, %c0_40] : memref<1x8x128xf32, #tpu.memory_space<vmem>>, vector<1x8x128xf32>
        %85 = vector.shape_cast %84 : vector<1x8x128xf32> to vector<8x128xf32>
        %86 = vector.shape_cast %83 : vector<8x128xf32> to vector<1x8x128xf32>
        tpu.vector_store %arg6[%c0_38, %c0_39, %c0_40], %86 {strides = array<i32>} : memref<1x8x128xf32, #tpu.memory_space<vmem>>, vector<1x8x128xf32>,
      } else {
      }
    } else {
    }
    return
  }
  func.func @transform_0(%arg0: i32, %arg1: i32) -> i32 {
    %c0_i32 = arith.constant 0 : i32
    %c0_i32_0 = arith.constant 0 : i32
    return %c0_i32 : i32
  }
  func.func @transform_1(%arg0: i32, %arg1: i32) -> (i32, i32) {
    %c0_i32 = arith.constant 0 : i32
    %c0_i32_0 = arith.constant 0 : i32
    return %c0_i32, %arg1 : i32, i32
  }
  func.func @transform_2(%arg0: i32, %arg1: i32) -> (i32, i32, i32) {
    %c0_i32 = arith.constant 0 : i32
    %c0_i32_0 = arith.constant 0 : i32
    return %arg0, %arg1, %c0_i32 : i32, i32, i32
  }
  func.func @transform_3(%arg0: i32, %arg1: i32) -> (i32, i32, i32) {
    %c0_i32 = arith.constant 0 : i32
    %c0_i32_0 = arith.constant 0 : i32
    %c0_i32_1 = arith.constant 0 : i32
    return %arg0, %c0_i32, %c0_i32_0 : i32, i32, i32
  }
  func.func @transform_4(%arg0: i32, %arg1: i32) -> (i32, i32, i32) {
    %c0_i32 = arith.constant 0 : i32
    %c0_i32_0 = arith.constant 0 : i32
    %c0_i32_1 = arith.constant 0 : i32
    return %arg0, %c0_i32, %c0_i32_0 : i32, i32, i32
  }
}

</mosaic_0001>

<llo_original>
// kernel: get_mu_logvar.1
$region0: #{get_mu_logvar.1}
  #allocation0 [shape = 'u32[]', space=smem, size = 0x4, offset = 0x4, fixed_abs, tag = 'smem constant byte address 0x4 - core index']
  #allocation1 [shape = 'u32[144,128]{1,0:T(1,128)}', space=vmem, size = 0x12000, scoped, tag = 'internal scratch']
  #allocation2 [shape = 'f32[8,1024]{1,0:T(8,128)}', space=vmem, size = 0x8000, scoped, tag = 'scratch operand']
  %s0 = inlined_call_operand.vmem [shape: f32[2], index: 0, kind: input, shape index: {}]
  %s1 = inlined_call_operand.vmem [shape: bf16[8,256], index: 1, kind: input, shape index: {}]
  %s2 = inlined_call_operand.hbm [shape: bf16[2,256,1024], index: 2, kind: input, shape index: {}]
  %s3 = inlined_call_operand.hbm [shape: bf16[2,1024,128], index: 3, kind: input, shape index: {}]
  %s4 = inlined_call_operand.vmem [shape: f32[2,8,128], index: 4, kind: output, shape index: {}]
  %s5 = sld [smem:[#allocation0]]
  $region77: #{get_mu_logvar.1} parent=0
    _
  %s7 = ssub.s32 1, %s5
  %s8 = scalar_select 0, %s7, %s5
  $region1: #{get_mu_logvar.1} parent=0
    #allocation3 [shape = 'u8[512]{0}', space=smem, size = 0x200, scoped, tag = 'input window, operand 0, single buffered']
    #allocation4 [shape = 's32[2]{0}', space=sflag, size = 0x8, scoped, tag = 'scoped memory for get_mu_logvar.1']
    #allocation5 [shape = 's32[2]{0}', space=sflag, size = 0x8, scoped, tag = 'scoped memory for get_mu_logvar.1']
    #allocation6 [shape = 'u8[1048576]{0}', space=vmem, size = 0x100000, scoped, tag = 'input window, operand 2']
    #allocation7 [shape = 'u8[524288]{0}', space=vmem, size = 0x80000, scoped, tag = 'input window, operand 3']
    #allocation8 [shape = 's32[2]{0}', space=sflag, size = 0x8, scoped, tag = 'scoped memory for get_mu_logvar.1']
    %9 = vsyncpa [#allocation5], 0
    %10 = vsyncpa [#allocation4], 0
    %s11 = scalar_lea.sflag [#allocation4], 1
    %12 = vsyncpa %s11, 0
    %13 = vsyncpa [#allocation8], 0
    %s14 = scalar_lea.sflag [#allocation8], 1
    %15 = vsyncpa %s14, 0
    loop: start=0, step=1, limit=4
    $region2: #{get_mu_logvar.1} parent=1 // loop_pre_header
      _
    $region3: #{get_mu_logvar.1} parent=1 // loop_header
      %s17 = sphi 0, %s21
      %p18 = scmp.ge.s32.totalorder %s17, 4
      %s24 = sphi 0, %s36
      %s25 = sphi 0, %s32
      %s26 = sphi 0, %s24
      %s27 = sphi 0, %s25
      %s28 = sphi 0, %s26
      %s29 = sphi 0, %s27
      %s37 = sphi 0, %s37
      %s39 = sphi 0, %s37
      %s40 = sphi 0, %s39
      %s54 = sphi 0, %s40
      %s60 = sphi 0, %s62
      %s63 = sphi 0, %s60
      %s64 = sphi 0, %s63
      %s80 = sphi 0, %s64
      %s88 = sphi 0, %s90
      %s91 = sphi 0, %s88
      %s92 = sphi 0, %s91
      %s108 = sphi 0, %s92
      %s114 = sphi 0, %s116
      %s117 = sphi 0, %s114
      %s118 = sphi 0, %s117
      %s134 = sphi 0, %s118
      %s140 = sphi 0, %s142
      %s143 = sphi 0, %s140
      %s144 = sphi 0, %s143
      %s160 = sphi 0, %s144
    $region4: #{get_mu_logvar.1} parent=1 // loop_header_branch
      %20 = sbr.rel (%p18) target = $region8
    $region5: #{get_mu_logvar.1} parent=1 // loop_body
      %s22 = ssub.s32 %s17, 1
      %s23 = ssub.s32 %s17, 2
      %s30 = sadd.s32 1, %s25
      %p31 = scmp.ge.s32.totalorder %s30, 1
      %s32 = scalar_select %p31, 0, %s30
      %s33 = sadd.s32 1, %s24
      %s34 = scalar_select %p31, %s33, %s24
      %p35 = scmp.ge.s32.totalorder %s34, 2
      %s36 = scalar_select %p35, 0, %s34
      %s38 = sadd.s32 %s37, 1
      %p41 = scmp.eq.s32.totalorder %s17, 1
      %p42 = scmp.ne.s32.totalorder %s37, %s39
      %p43 = scmp.eq.s32.totalorder %s17, 0
      %p44 = por %p42, %p43
      %p45 = scmp.ne.s32.totalorder %s37, %s39
      %p46 = scmp.eq.s32.totalorder %s22, 1
      %p47 = por %p45, %p46
      %p48 = scmp.ne.s32.totalorder %s39, %s40
      %p49 = scmp.eq.s32.totalorder %s22, 0
      %p50 = por %p48, %p49
      %p51 = scmp.ne.s32.totalorder %s39, %s40
      %p52 = scmp.eq.s32.totalorder %s23, 1
      %p53 = por %p51, %p52
      %p55 = scmp.ne.s32.totalorder %s40, %s54
      %p56 = scmp.eq.s32.totalorder %s23, 0
      %p57 = por %p55, %p56
      %s58 = ssub.s32 %s25, %s32
      %p59 = scmp.eq.s32.totalorder %s58, 0
      %s61 = sadd.s32 %s60, 1
      %s62 = scalar_select %p59, %s60, %s61
      %p65 = pneg %p59
      %p66 = scmp.eq.s32.totalorder %s17, 1
      %p67 = por %p65, %p66
      %p68 = scmp.ne.s32.totalorder %s60, %s63
      %p69 = scmp.eq.s32.totalorder %s17, 0
      %p70 = por %p68, %p69
      %p71 = scmp.ne.s32.totalorder %s60, %s63
      %p72 = scmp.eq.s32.totalorder %s22, 1
      %p73 = por %p71, %p72
      %p74 = scmp.ne.s32.totalorder %s63, %s64
      %p75 = scmp.eq.s32.totalorder %s22, 0
      %p76 = por %p74, %p75
      %p77 = scmp.ne.s32.totalorder %s63, %s64
      %p78 = scmp.eq.s32.totalorder %s23, 1
      %p79 = por %p77, %p78
      %p81 = scmp.ne.s32.totalorder %s64, %s80
      %p82 = scmp.eq.s32.totalorder %s23, 0
      %p83 = por %p81, %p82
      %s84 = ssub.s32 %s24, %s36
      %s85 = ssub.s32 %s25, %s32
      %s86 = sor.u32 %s84, %s85
      %p87 = scmp.eq.s32.totalorder %s86, 0
      %s89 = sadd.s32 %s88, 1
      %s90 = scalar_select %p87, %s88, %s89
      %p93 = pneg %p87
      %p94 = scmp.eq.s32.totalorder %s17, 1
      %p95 = por %p93, %p94
      %p96 = scmp.ne.s32.totalorder %s88, %s91
      %p97 = scmp.eq.s32.totalorder %s17, 0
      %p98 = por %p96, %p97
      %p99 = scmp.ne.s32.totalorder %s88, %s91
      %p100 = scmp.eq.s32.totalorder %s22, 1
      %p101 = por %p99, %p100
      %p102 = scmp.ne.s32.totalorder %s91, %s92
      %p103 = scmp.eq.s32.totalorder %s22, 0
      %p104 = por %p102, %p103
      %p105 = scmp.ne.s32.totalorder %s91, %s92
      %p106 = scmp.eq.s32.totalorder %s23, 1
      %p107 = por %p105, %p106
      %p109 = scmp.ne.s32.totalorder %s92, %s108
      %p110 = scmp.eq.s32.totalorder %s23, 0
      %p111 = por %p109, %p110
      %s112 = ssub.s32 %s24, %s36
      %p113 = scmp.eq.s32.totalorder %s112, 0
      %s115 = sadd.s32 %s114, 1
      %s116 = scalar_select %p113, %s114, %s115
      %p119 = pneg %p113
      %p120 = scmp.eq.s32.totalorder %s17, 1
      %p121 = por %p119, %p120
      %p122 = scmp.ne.s32.totalorder %s114, %s117
      %p123 = scmp.eq.s32.totalorder %s17, 0
      %p124 = por %p122, %p123
      %p125 = scmp.ne.s32.totalorder %s114, %s117
      %p126 = scmp.eq.s32.totalorder %s22, 1
      %p127 = por %p125, %p126
      %p128 = scmp.ne.s32.totalorder %s117, %s118
      %p129 = scmp.eq.s32.totalorder %s22, 0
      %p130 = por %p128, %p129
      %p131 = scmp.ne.s32.totalorder %s117, %s118
      %p132 = scmp.eq.s32.totalorder %s23, 1
      %p133 = por %p131, %p132
      %p135 = scmp.ne.s32.totalorder %s118, %s134
      %p136 = scmp.eq.s32.totalorder %s23, 0
      %p137 = por %p135, %p136
      %s138 = ssub.s32 %s24, %s36
      %p139 = scmp.eq.s32.totalorder %s138, 0
      %s141 = sadd.s32 %s140, 1
      %s142 = scalar_select %p139, %s140, %s141
      %p145 = pneg %p139
      %p146 = scmp.eq.s32.totalorder %s17, 1
      %p147 = por %p145, %p146
      %p148 = scmp.ne.s32.totalorder %s140, %s143
      %p149 = scmp.eq.s32.totalorder %s17, 0
      %p150 = por %p148, %p149
      %p151 = scmp.ne.s32.totalorder %s140, %s143
      %p152 = scmp.eq.s32.totalorder %s22, 1
      %p153 = por %p151, %p152
      %p154 = scmp.ne.s32.totalorder %s143, %s144
      %p155 = scmp.eq.s32.totalorder %s22, 0
      %p156 = por %p154, %p155
      %p157 = scmp.ne.s32.totalorder %s143, %s144
      %p158 = scmp.eq.s32.totalorder %s23, 1
      %p159 = por %p157, %p158
      %p161 = scmp.ne.s32.totalorder %s144, %s160
      %p162 = scmp.eq.s32.totalorder %s23, 0
      %p163 = por %p161, %p162
      %p164 = scmp.le.s32.totalorder 1, %s17
      %p165 = scmp.lt.s32.totalorder %s17, 3
      %p166 = pnand %p164, %p165
      %p167 = pneg %p166
      // Predicated region
      $region9: #{get_mu_logvar.1} parent=5 // pred_check
        _
      $region10: #{get_mu_logvar.1} parent=5 // pred_check_branch
        %169 = sbr.rel (%p166) target = $region12
      $region11: #{get_mu_logvar.1} parent=5 // pred_region
        %s170 = ssub.s32 %s17, 1
        // Predicated region
        $region13: #{get_mu_logvar.1} parent=11 // pred_check
          %p171 = pneg %p50
        $region14: #{get_mu_logvar.1} parent=11 // pred_check_branch
          %173 = sbr.rel (%p171) target = $region16
        $region15: #{get_mu_logvar.1} parent=11 // pred_region
          %s175 = ssub.s32 16, 16
          %176 = vsyncadd [#allocation5], %s175
          %s178 = sshll.u32 %s0, 4
          %s179 = int_to_ptr.vmem [resolvable:$true] %s178
          %181 = dma.vmem_to_smem %s179, 16, [#allocation3], [#allocation5]
        $region16: #{get_mu_logvar.1} parent=11 // pred_fallthru
          _
        // Predicated region
        $region17: #{get_mu_logvar.1} parent=11 // pred_check
          %p182 = pneg %p76
        $region18: #{get_mu_logvar.1} parent=11 // pred_check_branch
          %184 = sbr.rel (%p182) target = $region20
        $region19: #{get_mu_logvar.1} parent=11 // pred_region
          %s185 = smul.u32 2, %s27
          %p186 = scmp.lt.s32.totalorder %s185, 1
          %s187 = scalar_select %p186, %s185, 1
          %s188 = smul.addr %s187, 4
          %s189 = scalar_lea.vmem %s1, %s188
          %s190 = smul.u32 2, %s27
        $region20: #{get_mu_logvar.1} parent=11 // pred_fallthru
          _
      $region12: #{get_mu_logvar.1} parent=5 // pred_fallthru
        _
      %p191 = scmp.lt.s32.totalorder %s17, 2
      // Predicated region
      $region21: #{get_mu_logvar.1} parent=5 // pred_check
        %p192 = pneg %p191
      $region22: #{get_mu_logvar.1} parent=5 // pred_check_branch
        %194 = sbr.rel (%p192) target = $region24
      $region23: #{get_mu_logvar.1} parent=5 // pred_region
        // Predicated region
        $region25: #{get_mu_logvar.1} parent=23 // pred_check
          %p195 = pneg %p98
        $region26: #{get_mu_logvar.1} parent=23 // pred_check_branch
          %197 = sbr.rel (%p195) target = $region28
        $region27: #{get_mu_logvar.1} parent=23 // pred_region
          %s198 = sand.u32 %s88, 1
          %s199 = scalar_lea.sflag [#allocation4], %s198
          %s200 = sand.u32 %s88, 1
          %s201 = smul.addr %s200, 1024
          %s202 = scalar_lea.vmem [#allocation6], %s201
          %s203 = smul.u32 32, %s25
          %s205 = ssub.s32 16384, 16384
          %206 = vsyncadd %s199, %s205
          %s207 = smul.addr %s203, 8
          %s208 = smul.addr %s24, 256
          %s209 = sadd.s32 %s207, %s208
          %s210 = smul.addr %s209, 64
          %s211 = scalar_lea.hbm %s2, %s210
          %s212 = sshll.u32 %s202, 4
          %s213 = int_to_ptr.vmem [resolvable:$true] %s212
          %218 = dma.hbm_to_vmem [thread:$0]  %s211, 16384, %s213, %s199, 512, 512, 32
        $region28: #{get_mu_logvar.1} parent=23 // pred_fallthru
          _
        // Predicated region
        $region29: #{get_mu_logvar.1} parent=23 // pred_check
          %p219 = pneg %p124
        $region30: #{get_mu_logvar.1} parent=23 // pred_check_branch
          %221 = sbr.rel (%p219) target = $region32
        $region31: #{get_mu_logvar.1} parent=23 // pred_region
          %s222 = sand.u32 %s114, 1
          %s223 = scalar_lea.sflag [#allocation8], %s222
          %s224 = sand.u32 %s114, 1
          %s225 = smul.addr %s224, 512
          %s226 = scalar_lea.vmem [#allocation7], %s225
          %s228 = ssub.s32 8192, 8192
          %229 = vsyncadd %s223, %s228
          %s230 = smul.addr %s24, 128
          %s231 = smul.addr %s230, 64
          %s232 = scalar_lea.hbm %s3, %s231
          %s233 = sshll.u32 %s226, 4
          %s234 = int_to_ptr.vmem [resolvable:$true] %s233
          %239 = dma.hbm_to_vmem [thread:$0]  %s232, 8192, %s234, %s223, 64, 64, 4
        $region32: #{get_mu_logvar.1} parent=23 // pred_fallthru
          _
      $region24: #{get_mu_logvar.1} parent=5 // pred_fallthru
        _
      %p240 = scmp.le.s32.totalorder 1, %s17
      %p241 = scmp.lt.s32.totalorder %s17, 3
      %p242 = pnand %p240, %p241
      %p243 = pneg %p242
      // Predicated region
      $region33: #{get_mu_logvar.1} parent=5 // pred_check
        _
      $region34: #{get_mu_logvar.1} parent=5 // pred_check_branch
        %245 = sbr.rel (%p242) target = $region36
      $region35: #{get_mu_logvar.1} parent=5 // pred_region
        %s246 = ssub.s32 %s17, 1
        // Predicated region
        $region37: #{get_mu_logvar.1} parent=35 // pred_check
          %p247 = pneg %p50
        $region38: #{get_mu_logvar.1} parent=35 // pred_check_branch
          %249 = sbr.rel (%p247) target = $region40
        $region39: #{get_mu_logvar.1} parent=35 // pred_region
          %250 = dma.done [#allocation5], 16
        $region40: #{get_mu_logvar.1} parent=35 // pred_fallthru
          _
        %s251 = sand.u32 %s91, 1
        %s252 = scalar_lea.sflag [#allocation4], %s251
        %s253 = sand.u32 %s91, 1
        %s254 = smul.addr %s253, 1024
        %s255 = scalar_lea.vmem [#allocation6], %s254
        // Predicated region
        $region41: #{get_mu_logvar.1} parent=35 // pred_check
          %p256 = pneg %p104
        $region42: #{get_mu_logvar.1} parent=35 // pred_check_branch
          %258 = sbr.rel (%p256) target = $region44
        $region43: #{get_mu_logvar.1} parent=35 // pred_region
          %259 = dma.done %s252, 16384
        $region44: #{get_mu_logvar.1} parent=35 // pred_fallthru
          _
        %s260 = sand.u32 %s117, 1
        %s261 = scalar_lea.sflag [#allocation8], %s260
        %s262 = sand.u32 %s117, 1
        %s263 = smul.addr %s262, 512
        %s264 = scalar_lea.vmem [#allocation7], %s263
        // Predicated region
        $region45: #{get_mu_logvar.1} parent=35 // pred_check
          %p265 = pneg %p130
        $region46: #{get_mu_logvar.1} parent=35 // pred_check_branch
          %267 = sbr.rel (%p265) target = $region48
        $region47: #{get_mu_logvar.1} parent=35 // pred_region
          %268 = dma.done %s261, 8192
        $region48: #{get_mu_logvar.1} parent=35 // pred_fallthru
          _
        %269 = sfence
        %p270 = pneg %p50
        %p271 = pneg %p47
        %s272 = smul.u32 2, %s27
        %p273 = scmp.lt.s32.totalorder %s272, 1
        %s274 = scalar_select %p273, %s272, 1
        %s275 = smul.addr %s274, 4
        %s276 = scalar_lea.vmem %s1, %s275
        %p277 = pneg %p76
        %p278 = pneg %p73
        %s279 = sand.u32 %s91, 1
        %s280 = scalar_lea.sflag [#allocation4], %s279
        %s281 = sand.u32 %s91, 1
        %s282 = smul.addr %s281, 1024
        %s283 = scalar_lea.vmem [#allocation6], %s282
        %p284 = pneg %p104
        %p285 = pneg %p101
        %s286 = sand.u32 %s117, 1
        %s287 = scalar_lea.sflag [#allocation8], %s286
        %s288 = sand.u32 %s117, 1
        %s289 = smul.addr %s288, 512
        %s290 = scalar_lea.vmem [#allocation7], %s289
        %p291 = pneg %p130
        %p292 = pneg %p127
        %p293 = pneg %p156
        %p294 = pneg %p153
        %p295 = scmp.lt.s32.totalorder %s26, 1
        %s296 = scalar_select %p295, %s26, 1
        %s297 = smul.addr %s296, 8
        %s298 = scalar_lea.vmem %s4, %s297
        %s299 = smul.u32 2, %s27
        %p300 = scmp.lt.s32.totalorder %s299, 1
        %s301 = scalar_select %p300, %s299, 1
        %s302 = smul.addr %s301, 4
        %s303 = scalar_lea.vmem %s1, %s302
        %s304 = smul.u32 2, %s27
        %s305 = smul.u32 32, %s27
        %p306 = scmp.lt.s32.totalorder %s26, 1
        %s307 = scalar_select %p306, %s26, 1
        %s308 = smul.addr %s307, 8
        %s309 = scalar_lea.vmem %s4, %s308
        %p311 = scmp.eq.s32.totalorder %s27, 0
        // Predicated region
        $region49: #{get_mu_logvar.1} parent=35 // pred_check
          %p312 = pneg %p311
        $region50: #{get_mu_logvar.1} parent=35 // pred_check_branch
          %314 = sbr.rel (%p312) target = $region52
        $region51: #{get_mu_logvar.1} parent=35 // pred_region
          %315 = vst [vmem:[#allocation2] sm:$0xff] 0.0
          %316 = vst [vmem:[#allocation2 + $0x8] sm:$0xff] 0.0
          %317 = vst [vmem:[#allocation2 + $0x10] sm:$0xff] 0.0
          %318 = vst [vmem:[#allocation2 + $0x18] sm:$0xff] 0.0
          %319 = vst [vmem:[#allocation2 + $0x20] sm:$0xff] 0.0
          %320 = vst [vmem:[#allocation2 + $0x28] sm:$0xff] 0.0
          %321 = vst [vmem:[#allocation2 + $0x30] sm:$0xff] 0.0
          %322 = vst [vmem:[#allocation2 + $0x38] sm:$0xff] 0.0
        $region52: #{get_mu_logvar.1} parent=35 // pred_fallthru
          _
        %v323 = vld [vmem:[#allocation2] sm:$0xff]
        %v324 = vld [vmem:[#allocation2 + $0x8] sm:$0xff]
        %v325 = vld [vmem:[#allocation2 + $0x10] sm:$0xff]
        %v326 = vld [vmem:[#allocation2 + $0x18] sm:$0xff]
        %v327 = vld [vmem:[#allocation2 + $0x20] sm:$0xff]
        %v328 = vld [vmem:[#allocation2 + $0x28] sm:$0xff]
        %v329 = vld [vmem:[#allocation2 + $0x30] sm:$0xff]
        %v330 = vld [vmem:[#allocation2 + $0x38] sm:$0xff]
        %v331 = vld [vmem:[%s303] sm:$0xff]
        %v332 = vld [vmem:[%s255] sm:$0xff]
        %v333 = vld [vmem:[%s255 + $0x8] sm:$0xff]
        %v334 = vld [vmem:[%s255 + $0x10] sm:$0xff]
        %v335 = vld [vmem:[%s255 + $0x18] sm:$0xff]
        %v336 = vld [vmem:[%s255 + $0x20] sm:$0xff]
        %v337 = vld [vmem:[%s255 + $0x28] sm:$0xff]
        %v338 = vld [vmem:[%s255 + $0x30] sm:$0xff]
        %v339 = vld [vmem:[%s255 + $0x38] sm:$0xff]
        %v340 = vld [vmem:[%s255 + $0x40] sm:$0xff]
        %v341 = vld [vmem:[%s255 + $0x48] sm:$0xff]
        %v342 = vld [vmem:[%s255 + $0x50] sm:$0xff]
        %v343 = vld [vmem:[%s255 + $0x58] sm:$0xff]
        %v344 = vld [vmem:[%s255 + $0x60] sm:$0xff]
        %v345 = vld [vmem:[%s255 + $0x68] sm:$0xff]
        %v346 = vld [vmem:[%s255 + $0x70] sm:$0xff]
        %v347 = vld [vmem:[%s255 + $0x78] sm:$0xff]
        %v348 = vld [vmem:[%s255 + $0x80] sm:$0xff]
        %v349 = vld [vmem:[%s255 + $0x88] sm:$0xff]
        %v350 = vld [vmem:[%s255 + $0x90] sm:$0xff]
        %v351 = vld [vmem:[%s255 + $0x98] sm:$0xff]
        %v352 = vld [vmem:[%s255 + $0xa0] sm:$0xff]
        %v353 = vld [vmem:[%s255 + $0xa8] sm:$0xff]
        %v354 = vld [vmem:[%s255 + $0xb0] sm:$0xff]
        %v355 = vld [vmem:[%s255 + $0xb8] sm:$0xff]
        %v356 = vld [vmem:[%s255 + $0xc0] sm:$0xff]
        %v357 = vld [vmem:[%s255 + $0xc8] sm:$0xff]
        %v358 = vld [vmem:[%s255 + $0xd0] sm:$0xff]
        %v359 = vld [vmem:[%s255 + $0xd8] sm:$0xff]
        %v360 = vld [vmem:[%s255 + $0xe0] sm:$0xff]
        %v361 = vld [vmem:[%s255 + $0xe8] sm:$0xff]
        %v362 = vld [vmem:[%s255 + $0xf0] sm:$0xff]
        %v363 = vld [vmem:[%s255 + $0xf8] sm:$0xff]
        %v364 = vld [vmem:[%s255 + $0x100] sm:$0xff]
        %v365 = vld [vmem:[%s255 + $0x108] sm:$0xff]
        %v366 = vld [vmem:[%s255 + $0x110] sm:$0xff]
        %v367 = vld [vmem:[%s255 + $0x118] sm:$0xff]
        %v368 = vld [vmem:[%s255 + $0x120] sm:$0xff]
        %v369 = vld [vmem:[%s255 + $0x128] sm:$0xff]
        %v370 = vld [vmem:[%s255 + $0x130] sm:$0xff]
        %v371 = vld [vmem:[%s255 + $0x138] sm:$0xff]
        %v372 = vld [vmem:[%s255 + $0x140] sm:$0xff]
        %v373 = vld [vmem:[%s255 + $0x148] sm:$0xff]
        %v374 = vld [vmem:[%s255 + $0x150] sm:$0xff]
        %v375 = vld [vmem:[%s255 + $0x158] sm:$0xff]
        %v376 = vld [vmem:[%s255 + $0x160] sm:$0xff]
        %v377 = vld [vmem:[%s255 + $0x168] sm:$0xff]
        %v378 = vld [vmem:[%s255 + $0x170] sm:$0xff]
        %v379 = vld [vmem:[%s255 + $0x178] sm:$0xff]
        %v380 = vld [vmem:[%s255 + $0x180] sm:$0xff]
        %v381 = vld [vmem:[%s255 + $0x188] sm:$0xff]
        %v382 = vld [vmem:[%s255 + $0x190] sm:$0xff]
        %v383 = vld [vmem:[%s255 + $0x198] sm:$0xff]
        %v384 = vld [vmem:[%s255 + $0x1a0] sm:$0xff]
        %v385 = vld [vmem:[%s255 + $0x1a8] sm:$0xff]
        %v386 = vld [vmem:[%s255 + $0x1b0] sm:$0xff]
        %v387 = vld [vmem:[%s255 + $0x1b8] sm:$0xff]
        %v388 = vld [vmem:[%s255 + $0x1c0] sm:$0xff]
        %v389 = vld [vmem:[%s255 + $0x1c8] sm:$0xff]
        %v390 = vld [vmem:[%s255 + $0x1d0] sm:$0xff]
        %v391 = vld [vmem:[%s255 + $0x1d8] sm:$0xff]
        %v392 = vld [vmem:[%s255 + $0x1e0] sm:$0xff]
        %v393 = vld [vmem:[%s255 + $0x1e8] sm:$0xff]
        %v394 = vld [vmem:[%s255 + $0x1f0] sm:$0xff]
        %v395 = vld [vmem:[%s255 + $0x1f8] sm:$0xff]
        %v396 = vld [vmem:[%s255 + $0x200] sm:$0xff]
        %v397 = vld [vmem:[%s255 + $0x208] sm:$0xff]
        %v398 = vld [vmem:[%s255 + $0x210] sm:$0xff]
        %v399 = vld [vmem:[%s255 + $0x218] sm:$0xff]
        %v400 = vld [vmem:[%s255 + $0x220] sm:$0xff]
        %v401 = vld [vmem:[%s255 + $0x228] sm:$0xff]
        %v402 = vld [vmem:[%s255 + $0x230] sm:$0xff]
        %v403 = vld [vmem:[%s255 + $0x238] sm:$0xff]
        %v404 = vld [vmem:[%s255 + $0x240] sm:$0xff]
        %v405 = vld [vmem:[%s255 + $0x248] sm:$0xff]
        %v406 = vld [vmem:[%s255 + $0x250] sm:$0xff]
        %v407 = vld [vmem:[%s255 + $0x258] sm:$0xff]
        %v408 = vld [vmem:[%s255 + $0x260] sm:$0xff]
        %v409 = vld [vmem:[%s255 + $0x268] sm:$0xff]
        %v410 = vld [vmem:[%s255 + $0x270] sm:$0xff]
        %v411 = vld [vmem:[%s255 + $0x278] sm:$0xff]
        %v412 = vld [vmem:[%s255 + $0x280] sm:$0xff]
        %v413 = vld [vmem:[%s255 + $0x288] sm:$0xff]
        %v414 = vld [vmem:[%s255 + $0x290] sm:$0xff]
        %v415 = vld [vmem:[%s255 + $0x298] sm:$0xff]
        %v416 = vld [vmem:[%s255 + $0x2a0] sm:$0xff]
        %v417 = vld [vmem:[%s255 + $0x2a8] sm:$0xff]
        %v418 = vld [vmem:[%s255 + $0x2b0] sm:$0xff]
        %v419 = vld [vmem:[%s255 + $0x2b8] sm:$0xff]
        %v420 = vld [vmem:[%s255 + $0x2c0] sm:$0xff]
        %v421 = vld [vmem:[%s255 + $0x2c8] sm:$0xff]
        %v422 = vld [vmem:[%s255 + $0x2d0] sm:$0xff]
        %v423 = vld [vmem:[%s255 + $0x2d8] sm:$0xff]
        %v424 = vld [vmem:[%s255 + $0x2e0] sm:$0xff]
        %v425 = vld [vmem:[%s255 + $0x2e8] sm:$0xff]
        %v426 = vld [vmem:[%s255 + $0x2f0] sm:$0xff]
        %v427 = vld [vmem:[%s255 + $0x2f8] sm:$0xff]
        %v428 = vld [vmem:[%s255 + $0x300] sm:$0xff]
        %v429 = vld [vmem:[%s255 + $0x308] sm:$0xff]
        %v430 = vld [vmem:[%s255 + $0x310] sm:$0xff]
        %v431 = vld [vmem:[%s255 + $0x318] sm:$0xff]
        %v432 = vld [vmem:[%s255 + $0x320] sm:$0xff]
        %v433 = vld [vmem:[%s255 + $0x328] sm:$0xff]
        %v434 = vld [vmem:[%s255 + $0x330] sm:$0xff]
        %v435 = vld [vmem:[%s255 + $0x338] sm:$0xff]
        %v436 = vld [vmem:[%s255 + $0x340] sm:$0xff]
        %v437 = vld [vmem:[%s255 + $0x348] sm:$0xff]
        %v438 = vld [vmem:[%s255 + $0x350] sm:$0xff]
        %v439 = vld [vmem:[%s255 + $0x358] sm:$0xff]
        %v440 = vld [vmem:[%s255 + $0x360] sm:$0xff]
        %v441 = vld [vmem:[%s255 + $0x368] sm:$0xff]
        %v442 = vld [vmem:[%s255 + $0x370] sm:$0xff]
        %v443 = vld [vmem:[%s255 + $0x378] sm:$0xff]
        %v444 = vld [vmem:[%s255 + $0x380] sm:$0xff]
        %v445 = vld [vmem:[%s255 + $0x388] sm:$0xff]
        %v446 = vld [vmem:[%s255 + $0x390] sm:$0xff]
        %v447 = vld [vmem:[%s255 + $0x398] sm:$0xff]
        %v448 = vld [vmem:[%s255 + $0x3a0] sm:$0xff]
        %v449 = vld [vmem:[%s255 + $0x3a8] sm:$0xff]
        %v450 = vld [vmem:[%s255 + $0x3b0] sm:$0xff]
        %v451 = vld [vmem:[%s255 + $0x3b8] sm:$0xff]
        %v452 = vld [vmem:[%s255 + $0x3c0] sm:$0xff]
        %v453 = vld [vmem:[%s255 + $0x3c8] sm:$0xff]
        %v454 = vld [vmem:[%s255 + $0x3d0] sm:$0xff]
        %v455 = vld [vmem:[%s255 + $0x3d8] sm:$0xff]
        %v456 = vld [vmem:[%s255 + $0x3e0] sm:$0xff]
        %v457 = vld [vmem:[%s255 + $0x3e8] sm:$0xff]
        %v458 = vld [vmem:[%s255 + $0x3f0] sm:$0xff]
        %v459 = vld [vmem:[%s255 + $0x3f8] sm:$0xff]
        %v461 = vunpack.c.l.b16 %v331
        %v462 = vunpack.c.h.b16 %v331
        %v463 = vpack.c.b16 %v461, %v461
        %v464 = vpack.c.b16 %v462, %v462
        %v595 = vunpack.c.l.b16 %v332
        %v596 = vunpack.c.h.b16 %v332
        %v597 = vunpack.c.l.b16 %v333
        %v598 = vunpack.c.h.b16 %v333
        %v599 = vunpack.c.l.b16 %v334
        %v600 = vunpack.c.h.b16 %v334
        %v601 = vunpack.c.l.b16 %v335
        %v602 = vunpack.c.h.b16 %v335
        %v603 = vunpack.c.l.b16 %v336
        %v604 = vunpack.c.h.b16 %v336
        %v605 = vunpack.c.l.b16 %v337
        %v606 = vunpack.c.h.b16 %v337
        %v607 = vunpack.c.l.b16 %v338
        %v608 = vunpack.c.h.b16 %v338
        %v609 = vunpack.c.l.b16 %v339
        %v610 = vunpack.c.h.b16 %v339
        %v611 = vunpack.c.l.b16 %v340
        %v612 = vunpack.c.h.b16 %v340
        %v613 = vunpack.c.l.b16 %v341
        %v614 = vunpack.c.h.b16 %v341
        %v615 = vunpack.c.l.b16 %v342
        %v616 = vunpack.c.h.b16 %v342
        %v617 = vunpack.c.l.b16 %v343
        %v618 = vunpack.c.h.b16 %v343
        %v619 = vunpack.c.l.b16 %v344
        %v620 = vunpack.c.h.b16 %v344
        %v621 = vunpack.c.l.b16 %v345
        %v622 = vunpack.c.h.b16 %v345
        %v623 = vunpack.c.l.b16 %v346
        %v624 = vunpack.c.h.b16 %v346
        %v625 = vunpack.c.l.b16 %v347
        %v626 = vunpack.c.h.b16 %v347
        %v627 = vunpack.c.l.b16 %v348
        %v628 = vunpack.c.h.b16 %v348
        %v629 = vunpack.c.l.b16 %v349
        %v630 = vunpack.c.h.b16 %v349
        %v631 = vunpack.c.l.b16 %v350
        %v632 = vunpack.c.h.b16 %v350
        %v633 = vunpack.c.l.b16 %v351
        %v634 = vunpack.c.h.b16 %v351
        %v635 = vunpack.c.l.b16 %v352
        %v636 = vunpack.c.h.b16 %v352
        %v637 = vunpack.c.l.b16 %v353
        %v638 = vunpack.c.h.b16 %v353
        %v639 = vunpack.c.l.b16 %v354
        %v640 = vunpack.c.h.b16 %v354
        %v641 = vunpack.c.l.b16 %v355
        %v642 = vunpack.c.h.b16 %v355
        %v643 = vunpack.c.l.b16 %v356
        %v644 = vunpack.c.h.b16 %v356
        %v645 = vunpack.c.l.b16 %v357
        %v646 = vunpack.c.h.b16 %v357
        %v647 = vunpack.c.l.b16 %v358
        %v648 = vunpack.c.h.b16 %v358
        %v649 = vunpack.c.l.b16 %v359
        %v650 = vunpack.c.h.b16 %v359
        %v651 = vunpack.c.l.b16 %v360
        %v652 = vunpack.c.h.b16 %v360
        %v653 = vunpack.c.l.b16 %v361
        %v654 = vunpack.c.h.b16 %v361
        %v655 = vunpack.c.l.b16 %v362
        %v656 = vunpack.c.h.b16 %v362
        %v657 = vunpack.c.l.b16 %v363
        %v658 = vunpack.c.h.b16 %v363
        %v659 = vunpack.c.l.b16 %v364
        %v660 = vunpack.c.h.b16 %v364
        %v661 = vunpack.c.l.b16 %v365
        %v662 = vunpack.c.h.b16 %v365
        %v663 = vunpack.c.l.b16 %v366
        %v664 = vunpack.c.h.b16 %v366
        %v665 = vunpack.c.l.b16 %v367
        %v666 = vunpack.c.h.b16 %v367
        %v667 = vunpack.c.l.b16 %v368
        %v668 = vunpack.c.h.b16 %v368
        %v669 = vunpack.c.l.b16 %v369
        %v670 = vunpack.c.h.b16 %v369
        %v671 = vunpack.c.l.b16 %v370
        %v672 = vunpack.c.h.b16 %v370
        %v673 = vunpack.c.l.b16 %v371
        %v674 = vunpack.c.h.b16 %v371
        %v675 = vunpack.c.l.b16 %v372
        %v676 = vunpack.c.h.b16 %v372
        %v677 = vunpack.c.l.b16 %v373
        %v678 = vunpack.c.h.b16 %v373
        %v679 = vunpack.c.l.b16 %v374
        %v680 = vunpack.c.h.b16 %v374
        %v681 = vunpack.c.l.b16 %v375
        %v682 = vunpack.c.h.b16 %v375
        %v683 = vunpack.c.l.b16 %v376
        %v684 = vunpack.c.h.b16 %v376
        %v685 = vunpack.c.l.b16 %v377
        %v686 = vunpack.c.h.b16 %v377
        %v687 = vunpack.c.l.b16 %v378
        %v688 = vunpack.c.h.b16 %v378
        %v689 = vunpack.c.l.b16 %v379
        %v690 = vunpack.c.h.b16 %v379
        %v691 = vunpack.c.l.b16 %v380
        %v692 = vunpack.c.h.b16 %v380
        %v693 = vunpack.c.l.b16 %v381
        %v694 = vunpack.c.h.b16 %v381
        %v695 = vunpack.c.l.b16 %v382
        %v696 = vunpack.c.h.b16 %v382
        %v697 = vunpack.c.l.b16 %v383
        %v698 = vunpack.c.h.b16 %v383
        %v699 = vunpack.c.l.b16 %v384
        %v700 = vunpack.c.h.b16 %v384
        %v701 = vunpack.c.l.b16 %v385
        %v702 = vunpack.c.h.b16 %v385
        %v703 = vunpack.c.l.b16 %v386
        %v704 = vunpack.c.h.b16 %v386
        %v705 = vunpack.c.l.b16 %v387
        %v706 = vunpack.c.h.b16 %v387
        %v707 = vunpack.c.l.b16 %v388
        %v708 = vunpack.c.h.b16 %v388
        %v709 = vunpack.c.l.b16 %v389
        %v710 = vunpack.c.h.b16 %v389
        %v711 = vunpack.c.l.b16 %v390
        %v712 = vunpack.c.h.b16 %v390
        %v713 = vunpack.c.l.b16 %v391
        %v714 = vunpack.c.h.b16 %v391
        %v715 = vunpack.c.l.b16 %v392
        %v716 = vunpack.c.h.b16 %v392
        %v717 = vunpack.c.l.b16 %v393
        %v718 = vunpack.c.h.b16 %v393
        %v719 = vunpack.c.l.b16 %v394
        %v720 = vunpack.c.h.b16 %v394
        %v721 = vunpack.c.l.b16 %v395
        %v722 = vunpack.c.h.b16 %v395
        %v723 = vunpack.c.l.b16 %v396
        %v724 = vunpack.c.h.b16 %v396
        %v725 = vunpack.c.l.b16 %v397
        %v726 = vunpack.c.h.b16 %v397
        %v727 = vunpack.c.l.b16 %v398
        %v728 = vunpack.c.h.b16 %v398
        %v729 = vunpack.c.l.b16 %v399
        %v730 = vunpack.c.h.b16 %v399
        %v731 = vunpack.c.l.b16 %v400
        %v732 = vunpack.c.h.b16 %v400
        %v733 = vunpack.c.l.b16 %v401
        %v734 = vunpack.c.h.b16 %v401
        %v735 = vunpack.c.l.b16 %v402
        %v736 = vunpack.c.h.b16 %v402
        %v737 = vunpack.c.l.b16 %v403
        %v738 = vunpack.c.h.b16 %v403
        %v739 = vunpack.c.l.b16 %v404
        %v740 = vunpack.c.h.b16 %v404
        %v741 = vunpack.c.l.b16 %v405
        %v742 = vunpack.c.h.b16 %v405
        %v743 = vunpack.c.l.b16 %v406
        %v744 = vunpack.c.h.b16 %v406
        %v745 = vunpack.c.l.b16 %v407
        %v746 = vunpack.c.h.b16 %v407
        %v747 = vunpack.c.l.b16 %v408
        %v748 = vunpack.c.h.b16 %v408
        %v749 = vunpack.c.l.b16 %v409
        %v750 = vunpack.c.h.b16 %v409
        %v751 = vunpack.c.l.b16 %v410
        %v752 = vunpack.c.h.b16 %v410
        %v753 = vunpack.c.l.b16 %v411
        %v754 = vunpack.c.h.b16 %v411
        %v755 = vunpack.c.l.b16 %v412
        %v756 = vunpack.c.h.b16 %v412
        %v757 = vunpack.c.l.b16 %v413
        %v758 = vunpack.c.h.b16 %v413
        %v759 = vunpack.c.l.b16 %v414
        %v760 = vunpack.c.h.b16 %v414
        %v761 = vunpack.c.l.b16 %v415
        %v762 = vunpack.c.h.b16 %v415
        %v763 = vunpack.c.l.b16 %v416
        %v764 = vunpack.c.h.b16 %v416
        %v765 = vunpack.c.l.b16 %v417
        %v766 = vunpack.c.h.b16 %v417
        %v767 = vunpack.c.l.b16 %v418
        %v768 = vunpack.c.h.b16 %v418
        %v769 = vunpack.c.l.b16 %v419
        %v770 = vunpack.c.h.b16 %v419
        %v771 = vunpack.c.l.b16 %v420
        %v772 = vunpack.c.h.b16 %v420
        %v773 = vunpack.c.l.b16 %v421
        %v774 = vunpack.c.h.b16 %v421
        %v775 = vunpack.c.l.b16 %v422
        %v776 = vunpack.c.h.b16 %v422
        %v777 = vunpack.c.l.b16 %v423
        %v778 = vunpack.c.h.b16 %v423
        %v779 = vunpack.c.l.b16 %v424
        %v780 = vunpack.c.h.b16 %v424
        %v781 = vunpack.c.l.b16 %v425
        %v782 = vunpack.c.h.b16 %v425
        %v783 = vunpack.c.l.b16 %v426
        %v784 = vunpack.c.h.b16 %v426
        %v785 = vunpack.c.l.b16 %v427
        %v786 = vunpack.c.h.b16 %v427
        %v787 = vunpack.c.l.b16 %v428
        %v788 = vunpack.c.h.b16 %v428
        %v789 = vunpack.c.l.b16 %v429
        %v790 = vunpack.c.h.b16 %v429
        %v791 = vunpack.c.l.b16 %v430
        %v792 = vunpack.c.h.b16 %v430
        %v793 = vunpack.c.l.b16 %v431
        %v794 = vunpack.c.h.b16 %v431
        %v795 = vunpack.c.l.b16 %v432
        %v796 = vunpack.c.h.b16 %v432
        %v797 = vunpack.c.l.b16 %v433
        %v798 = vunpack.c.h.b16 %v433
        %v799 = vunpack.c.l.b16 %v434
        %v800 = vunpack.c.h.b16 %v434
        %v801 = vunpack.c.l.b16 %v435
        %v802 = vunpack.c.h.b16 %v435
        %v803 = vunpack.c.l.b16 %v436
        %v804 = vunpack.c.h.b16 %v436
        %v805 = vunpack.c.l.b16 %v437
        %v806 = vunpack.c.h.b16 %v437
        %v807 = vunpack.c.l.b16 %v438
        %v808 = vunpack.c.h.b16 %v438
        %v809 = vunpack.c.l.b16 %v439
        %v810 = vunpack.c.h.b16 %v439
        %v811 = vunpack.c.l.b16 %v440
        %v812 = vunpack.c.h.b16 %v440
        %v813 = vunpack.c.l.b16 %v441
        %v814 = vunpack.c.h.b16 %v441
        %v815 = vunpack.c.l.b16 %v442
        %v816 = vunpack.c.h.b16 %v442
        %v817 = vunpack.c.l.b16 %v443
        %v818 = vunpack.c.h.b16 %v443
        %v819 = vunpack.c.l.b16 %v444
        %v820 = vunpack.c.h.b16 %v444
        %v821 = vunpack.c.l.b16 %v445
        %v822 = vunpack.c.h.b16 %v445
        %v823 = vunpack.c.l.b16 %v446
        %v824 = vunpack.c.h.b16 %v446
        %v825 = vunpack.c.l.b16 %v447
        %v826 = vunpack.c.h.b16 %v447
        %v827 = vunpack.c.l.b16 %v448
        %v828 = vunpack.c.h.b16 %v448
        %v829 = vunpack.c.l.b16 %v449
        %v830 = vunpack.c.h.b16 %v449
        %v831 = vunpack.c.l.b16 %v450
        %v832 = vunpack.c.h.b16 %v450
        %v833 = vunpack.c.l.b16 %v451
        %v834 = vunpack.c.h.b16 %v451
        %v835 = vunpack.c.l.b16 %v452
        %v836 = vunpack.c.h.b16 %v452
        %v837 = vunpack.c.l.b16 %v453
        %v838 = vunpack.c.h.b16 %v453
        %v839 = vunpack.c.l.b16 %v454
        %v840 = vunpack.c.h.b16 %v454
        %v841 = vunpack.c.l.b16 %v455
        %v842 = vunpack.c.h.b16 %v455
        %v843 = vunpack.c.l.b16 %v456
        %v844 = vunpack.c.h.b16 %v456
        %v845 = vunpack.c.l.b16 %v457
        %v846 = vunpack.c.h.b16 %v457
        %v847 = vunpack.c.l.b16 %v458
        %v848 = vunpack.c.h.b16 %v458
        %v849 = vunpack.c.l.b16 %v459
        %v850 = vunpack.c.h.b16 %v459
        %v851 = vpack.c.b16 %v603, %v595
        %v852 = vpack.c.b16 %v604, %v596
        %v853 = vpack.c.b16 %v605, %v597
        %v854 = vpack.c.b16 %v606, %v598
        %v855 = vpack.c.b16 %v607, %v599
        %v856 = vpack.c.b16 %v608, %v600
        %v857 = vpack.c.b16 %v609, %v601
        %v858 = vpack.c.b16 %v610, %v602
        %v859 = vpack.c.b16 %v619, %v611
        %v860 = vpack.c.b16 %v620, %v612
        %v861 = vpack.c.b16 %v621, %v613
        %v862 = vpack.c.b16 %v622, %v614
        %v863 = vpack.c.b16 %v623, %v615
        %v864 = vpack.c.b16 %v624, %v616
        %v865 = vpack.c.b16 %v625, %v617
        %v866 = vpack.c.b16 %v626, %v618
        %v867 = vpack.c.b16 %v635, %v627
        %v868 = vpack.c.b16 %v636, %v628
        %v869 = vpack.c.b16 %v637, %v629
        %v870 = vpack.c.b16 %v638, %v630
        %v871 = vpack.c.b16 %v639, %v631
        %v872 = vpack.c.b16 %v640, %v632
        %v873 = vpack.c.b16 %v641, %v633
        %v874 = vpack.c.b16 %v642, %v634
        %v875 = vpack.c.b16 %v651, %v643
        %v876 = vpack.c.b16 %v652, %v644
        %v877 = vpack.c.b16 %v653, %v645
        %v878 = vpack.c.b16 %v654, %v646
        %v879 = vpack.c.b16 %v655, %v647
        %v880 = vpack.c.b16 %v656, %v648
        %v881 = vpack.c.b16 %v657, %v649
        %v882 = vpack.c.b16 %v658, %v650
        %v883 = vpack.c.b16 %v667, %v659
        %v884 = vpack.c.b16 %v668, %v660
        %v885 = vpack.c.b16 %v669, %v661
        %v886 = vpack.c.b16 %v670, %v662
        %v887 = vpack.c.b16 %v671, %v663
        %v888 = vpack.c.b16 %v672, %v664
        %v889 = vpack.c.b16 %v673, %v665
        %v890 = vpack.c.b16 %v674, %v666
        %v891 = vpack.c.b16 %v683, %v675
        %v892 = vpack.c.b16 %v684, %v676
        %v893 = vpack.c.b16 %v685, %v677
        %v894 = vpack.c.b16 %v686, %v678
        %v895 = vpack.c.b16 %v687, %v679
        %v896 = vpack.c.b16 %v688, %v680
        %v897 = vpack.c.b16 %v689, %v681
        %v898 = vpack.c.b16 %v690, %v682
        %v899 = vpack.c.b16 %v699, %v691
        %v900 = vpack.c.b16 %v700, %v692
        %v901 = vpack.c.b16 %v701, %v693
        %v902 = vpack.c.b16 %v702, %v694
        %v903 = vpack.c.b16 %v703, %v695
        %v904 = vpack.c.b16 %v704, %v696
        %v905 = vpack.c.b16 %v705, %v697
        %v906 = vpack.c.b16 %v706, %v698
        %v907 = vpack.c.b16 %v715, %v707
        %v908 = vpack.c.b16 %v716, %v708
        %v909 = vpack.c.b16 %v717, %v709
        %v910 = vpack.c.b16 %v718, %v710
        %v911 = vpack.c.b16 %v719, %v711
        %v912 = vpack.c.b16 %v720, %v712
        %v913 = vpack.c.b16 %v721, %v713
        %v914 = vpack.c.b16 %v722, %v714
        %v915 = vpack.c.b16 %v731, %v723
        %v916 = vpack.c.b16 %v732, %v724
        %v917 = vpack.c.b16 %v733, %v725
        %v918 = vpack.c.b16 %v734, %v726
        %v919 = vpack.c.b16 %v735, %v727
        %v920 = vpack.c.b16 %v736, %v728
        %v921 = vpack.c.b16 %v737, %v729
        %v922 = vpack.c.b16 %v738, %v730
        %v923 = vpack.c.b16 %v747, %v739
        %v924 = vpack.c.b16 %v748, %v740
        %v925 = vpack.c.b16 %v749, %v741
        %v926 = vpack.c.b16 %v750, %v742
        %v927 = vpack.c.b16 %v751, %v743
        %v928 = vpack.c.b16 %v752, %v744
        %v929 = vpack.c.b16 %v753, %v745
        %v930 = vpack.c.b16 %v754, %v746
        %v931 = vpack.c.b16 %v763, %v755
        %v932 = vpack.c.b16 %v764, %v756
        %v933 = vpack.c.b16 %v765, %v757
        %v934 = vpack.c.b16 %v766, %v758
        %v935 = vpack.c.b16 %v767, %v759
        %v936 = vpack.c.b16 %v768, %v760
        %v937 = vpack.c.b16 %v769, %v761
        %v938 = vpack.c.b16 %v770, %v762
        %v939 = vpack.c.b16 %v779, %v771
        %v940 = vpack.c.b16 %v780, %v772
        %v941 = vpack.c.b16 %v781, %v773
        %v942 = vpack.c.b16 %v782, %v774
        %v943 = vpack.c.b16 %v783, %v775
        %v944 = vpack.c.b16 %v784, %v776
        %v945 = vpack.c.b16 %v785, %v777
        %v946 = vpack.c.b16 %v786, %v778
        %v947 = vpack.c.b16 %v795, %v787
        %v948 = vpack.c.b16 %v796, %v788
        %v949 = vpack.c.b16 %v797, %v789
        %v950 = vpack.c.b16 %v798, %v790
        %v951 = vpack.c.b16 %v799, %v791
        %v952 = vpack.c.b16 %v800, %v792
        %v953 = vpack.c.b16 %v801, %v793
        %v954 = vpack.c.b16 %v802, %v794
        %v955 = vpack.c.b16 %v811, %v803
        %v956 = vpack.c.b16 %v812, %v804
        %v957 = vpack.c.b16 %v813, %v805
        %v958 = vpack.c.b16 %v814, %v806
        %v959 = vpack.c.b16 %v815, %v807
        %v960 = vpack.c.b16 %v816, %v808
        %v961 = vpack.c.b16 %v817, %v809
        %v962 = vpack.c.b16 %v818, %v810
        %v963 = vpack.c.b16 %v827, %v819
        %v964 = vpack.c.b16 %v828, %v820
        %v965 = vpack.c.b16 %v829, %v821
        %v966 = vpack.c.b16 %v830, %v822
        %v967 = vpack.c.b16 %v831, %v823
        %v968 = vpack.c.b16 %v832, %v824
        %v969 = vpack.c.b16 %v833, %v825
        %v970 = vpack.c.b16 %v834, %v826
        %v971 = vpack.c.b16 %v843, %v835
        %v972 = vpack.c.b16 %v844, %v836
        %v973 = vpack.c.b16 %v845, %v837
        %v974 = vpack.c.b16 %v846, %v838
        %v975 = vpack.c.b16 %v847, %v839
        %v976 = vpack.c.b16 %v848, %v840
        %v977 = vpack.c.b16 %v849, %v841
        %v978 = vpack.c.b16 %v850, %v842
        %1107 = vmatprep.subr.bf16.mxu0 %v852
        %1108 = vmatpush1.bf16.msra.mxu0 %v851
        %1109 = vmatprep.subr.bf16.mxu0 %v860
        %1110 = vmatpush1.bf16.msra.mxu0 %v859
        %1111 = vmatprep.subr.bf16.mxu0 %v868
        %1112 = vmatpush1.bf16.msra.mxu0 %v867
        %1113 = vmatprep.subr.bf16.mxu0 %v876
        %1114 = vmatpush1.bf16.msra.mxu0 %v875
        %1115 = vmatprep.subr.bf16.mxu0 %v884
        %1116 = vmatpush1.bf16.msra.mxu0 %v883
        %1117 = vmatprep.subr.bf16.mxu0 %v892
        %1118 = vmatpush1.bf16.msra.mxu0 %v891
        %1119 = vmatprep.subr.bf16.mxu0 %v900
        %1120 = vmatpush1.bf16.msra.mxu0 %v899
        %1121 = vmatprep.subr.bf16.mxu0 %v908
        %1122 = vmatpush1.bf16.msra.mxu0 %v907
        %1123 = vmatprep.subr.bf16.mxu0 %v916
        %1124 = vmatpush1.bf16.msra.mxu0 %v915
        %1125 = vmatprep.subr.bf16.mxu0 %v924
        %1126 = vmatpush1.bf16.msra.mxu0 %v923
        %1127 = vmatprep.subr.bf16.mxu0 %v932
        %1128 = vmatpush1.bf16.msra.mxu0 %v931
        %1129 = vmatprep.subr.bf16.mxu0 %v940
        %1130 = vmatpush1.bf16.msra.mxu0 %v939
        %1131 = vmatprep.subr.bf16.mxu0 %v948
        %1132 = vmatpush1.bf16.msra.mxu0 %v947
        %1133 = vmatprep.subr.bf16.mxu0 %v956
        %1134 = vmatpush1.bf16.msra.mxu0 %v955
        %1135 = vmatprep.subr.bf16.mxu0 %v964
        %1136 = vmatpush1.bf16.msra.mxu0 %v963
        %1137 = vmatprep.subr.bf16.mxu0 %v972
        %1138 = vmatpush1.bf16.msra.mxu0 %v971
        %1139 = vmatprep.mubr.bf16.mxu0 %v464
        %1140 = vmatmul.mubr.bf16.gmra.mrb[0].mxu0 %v463
        %v1141 = vpop.f32.mrb[0].mxu0
        %v1142 = vadd.f32 0.0, %v1141
        %v1143 = vpop.f32.mrb[0].mxu0
        %v1144 = vadd.f32 0.0, %v1143
        %v1145 = vpop.f32.mrb[0].mxu0
        %v1146 = vpop.f32.mrb[0].mxu0
        %1147 = vdwg.mxu0
        %1148 = vmatprep.subr.bf16.mxu0 %v854
        %1149 = vmatpush1.bf16.msra.mxu0 %v853
        %1150 = vmatprep.subr.bf16.mxu0 %v862
        %1151 = vmatpush1.bf16.msra.mxu0 %v861
        %1152 = vmatprep.subr.bf16.mxu0 %v870
        %1153 = vmatpush1.bf16.msra.mxu0 %v869
        %1154 = vmatprep.subr.bf16.mxu0 %v878
        %1155 = vmatpush1.bf16.msra.mxu0 %v877
        %1156 = vmatprep.subr.bf16.mxu0 %v886
        %1157 = vmatpush1.bf16.msra.mxu0 %v885
        %1158 = vmatprep.subr.bf16.mxu0 %v894
        %1159 = vmatpush1.bf16.msra.mxu0 %v893
        %1160 = vmatprep.subr.bf16.mxu0 %v902
        %1161 = vmatpush1.bf16.msra.mxu0 %v901
        %1162 = vmatprep.subr.bf16.mxu0 %v910
        %1163 = vmatpush1.bf16.msra.mxu0 %v909
        %1164 = vmatprep.subr.bf16.mxu0 %v918
        %1165 = vmatpush1.bf16.msra.mxu0 %v917
        %1166 = vmatprep.subr.bf16.mxu0 %v926
        %1167 = vmatpush1.bf16.msra.mxu0 %v925
        %1168 = vmatprep.subr.bf16.mxu0 %v934
        %1169 = vmatpush1.bf16.msra.mxu0 %v933
        %1170 = vmatprep.subr.bf16.mxu0 %v942
        %1171 = vmatpush1.bf16.msra.mxu0 %v941
        %1172 = vmatprep.subr.bf16.mxu0 %v950
        %1173 = vmatpush1.bf16.msra.mxu0 %v949
        %1174 = vmatprep.subr.bf16.mxu0 %v958
        %1175 = vmatpush1.bf16.msra.mxu0 %v957
        %1176 = vmatprep.subr.bf16.mxu0 %v966
        %1177 = vmatpush1.bf16.msra.mxu0 %v965
        %1178 = vmatprep.subr.bf16.mxu0 %v974
        %1179 = vmatpush1.bf16.msra.mxu0 %v973
        %1180 = vmatprep.mubr.bf16.mxu0 %v464
        %1181 = vmatmul.mubr.bf16.gmra.mrb[0].mxu0 %v463
        %v1182 = vpop.f32.mrb[0].mxu0
        %v1183 = vadd.f32 0.0, %v1182
        %v1184 = vpop.f32.mrb[0].mxu0
        %v1185 = vadd.f32 0.0, %v1184
        %v1186 = vpop.f32.mrb[0].mxu0
        %v1187 = vpop.f32.mrb[0].mxu0
        %1188 = vdwg.mxu0
        %1189 = vmatprep.subr.bf16.mxu0 %v856
        %1190 = vmatpush1.bf16.msra.mxu0 %v855
        %1191 = vmatprep.subr.bf16.mxu0 %v864
        %1192 = vmatpush1.bf16.msra.mxu0 %v863
        %1193 = vmatprep.subr.bf16.mxu0 %v872
        %1194 = vmatpush1.bf16.msra.mxu0 %v871
        %1195 = vmatprep.subr.bf16.mxu0 %v880
        %1196 = vmatpush1.bf16.msra.mxu0 %v879
        %1197 = vmatprep.subr.bf16.mxu0 %v888
        %1198 = vmatpush1.bf16.msra.mxu0 %v887
        %1199 = vmatprep.subr.bf16.mxu0 %v896
        %1200 = vmatpush1.bf16.msra.mxu0 %v895
        %1201 = vmatprep.subr.bf16.mxu0 %v904
        %1202 = vmatpush1.bf16.msra.mxu0 %v903
        %1203 = vmatprep.subr.bf16.mxu0 %v912
        %1204 = vmatpush1.bf16.msra.mxu0 %v911
        %1205 = vmatprep.subr.bf16.mxu0 %v920
        %1206 = vmatpush1.bf16.msra.mxu0 %v919
        %1207 = vmatprep.subr.bf16.mxu0 %v928
        %1208 = vmatpush1.bf16.msra.mxu0 %v927
        %1209 = vmatprep.subr.bf16.mxu0 %v936
        %1210 = vmatpush1.bf16.msra.mxu0 %v935
        %1211 = vmatprep.subr.bf16.mxu0 %v944
        %1212 = vmatpush1.bf16.msra.mxu0 %v943
        %1213 = vmatprep.subr.bf16.mxu0 %v952
        %1214 = vmatpush1.bf16.msra.mxu0 %v951
        %1215 = vmatprep.subr.bf16.mxu0 %v960
        %1216 = vmatpush1.bf16.msra.mxu0 %v959
        %1217 = vmatprep.subr.bf16.mxu0 %v968
        %1218 = vmatpush1.bf16.msra.mxu0 %v967
        %1219 = vmatprep.subr.bf16.mxu0 %v976
        %1220 = vmatpush1.bf16.msra.mxu0 %v975
        %1221 = vmatprep.mubr.bf16.mxu0 %v464
        %1222 = vmatmul.mubr.bf16.gmra.mrb[0].mxu0 %v463
        %v1223 = vpop.f32.mrb[0].mxu0
        %v1224 = vadd.f32 0.0, %v1223
        %v1225 = vpop.f32.mrb[0].mxu0
        %v1226 = vadd.f32 0.0, %v1225
        %v1227 = vpop.f32.mrb[0].mxu0
        %v1228 = vpop.f32.mrb[0].mxu0
        %1229 = vdwg.mxu0
        %1230 = vmatprep.subr.bf16.mxu0 %v858
        %1231 = vmatpush1.bf16.msra.mxu0 %v857
        %1232 = vmatprep.subr.bf16.mxu0 %v866
        %1233 = vmatpush1.bf16.msra.mxu0 %v865
        %1234 = vmatprep.subr.bf16.mxu0 %v874
        %1235 = vmatpush1.bf16.msra.mxu0 %v873
        %1236 = vmatprep.subr.bf16.mxu0 %v882
        %1237 = vmatpush1.bf16.msra.mxu0 %v881
        %1238 = vmatprep.subr.bf16.mxu0 %v890
        %1239 = vmatpush1.bf16.msra.mxu0 %v889
        %1240 = vmatprep.subr.bf16.mxu0 %v898
        %1241 = vmatpush1.bf16.msra.mxu0 %v897
        %1242 = vmatprep.subr.bf16.mxu0 %v906
        %1243 = vmatpush1.bf16.msra.mxu0 %v905
        %1244 = vmatprep.subr.bf16.mxu0 %v914
        %1245 = vmatpush1.bf16.msra.mxu0 %v913
        %1246 = vmatprep.subr.bf16.mxu0 %v922
        %1247 = vmatpush1.bf16.msra.mxu0 %v921
        %1248 = vmatprep.subr.bf16.mxu0 %v930
        %1249 = vmatpush1.bf16.msra.mxu0 %v929
        %1250 = vmatprep.subr.bf16.mxu0 %v938
        %1251 = vmatpush1.bf16.msra.mxu0 %v937
        %1252 = vmatprep.subr.bf16.mxu0 %v946
        %1253 = vmatpush1.bf16.msra.mxu0 %v945
        %1254 = vmatprep.subr.bf16.mxu0 %v954
        %1255 = vmatpush1.bf16.msra.mxu0 %v953
        %1256 = vmatprep.subr.bf16.mxu0 %v962
        %1257 = vmatpush1.bf16.msra.mxu0 %v961
        %1258 = vmatprep.subr.bf16.mxu0 %v970
        %1259 = vmatpush1.bf16.msra.mxu0 %v969
        %1260 = vmatprep.subr.bf16.mxu0 %v978
        %1261 = vmatpush1.bf16.msra.mxu0 %v977
        %1262 = vmatprep.mubr.bf16.mxu0 %v464
        %1263 = vmatmul.mubr.bf16.gmra.mrb[0].mxu0 %v463
        %v1264 = vpop.f32.mrb[0].mxu0
        %v1265 = vadd.f32 0.0, %v1264
        %v1266 = vpop.f32.mrb[0].mxu0
        %v1267 = vadd.f32 0.0, %v1266
        %v1268 = vpop.f32.mrb[0].mxu0
        %v1269 = vpop.f32.mrb[0].mxu0
        %1270 = vdwg.mxu0
        %v1271 = vadd.f32 %v323, %v1142
        %v1272 = vadd.f32 %v324, %v1144
        %v1273 = vadd.f32 %v325, %v1183
        %v1274 = vadd.f32 %v326, %v1185
        %v1275 = vadd.f32 %v327, %v1224
        %v1276 = vadd.f32 %v328, %v1226
        %v1277 = vadd.f32 %v329, %v1265
        %v1278 = vadd.f32 %v330, %v1267
        %1279 = vst [vmem:[#allocation2] sm:$0xff] %v1271
        %1280 = vst [vmem:[#allocation2 + $0x8] sm:$0xff] %v1272
        %1281 = vst [vmem:[#allocation2 + $0x10] sm:$0xff] %v1273
        %1282 = vst [vmem:[#allocation2 + $0x18] sm:$0xff] %v1274
        %1283 = vst [vmem:[#allocation2 + $0x20] sm:$0xff] %v1275
        %1284 = vst [vmem:[#allocation2 + $0x28] sm:$0xff] %v1276
        %1285 = vst [vmem:[#allocation2 + $0x30] sm:$0xff] %v1277
        %1286 = vst [vmem:[#allocation2 + $0x38] sm:$0xff] %v1278
        // Predicated region
        $region53: #{get_mu_logvar.1} parent=35 // pred_check
          %p1287 = pneg %p311
        $region54: #{get_mu_logvar.1} parent=35 // pred_check_branch
          %1289 = sbr.rel (%p1287) target = $region56
        $region55: #{get_mu_logvar.1} parent=35 // pred_region
          %v1290 = vld [vmem:[#allocation2] sm:$0xff]
          %v1291 = vld [vmem:[#allocation2 + $0x8] sm:$0xff]
          %v1292 = vld [vmem:[#allocation2 + $0x10] sm:$0xff]
          %v1293 = vld [vmem:[#allocation2 + $0x18] sm:$0xff]
          %v1294 = vld [vmem:[#allocation2 + $0x20] sm:$0xff]
          %v1295 = vld [vmem:[#allocation2 + $0x28] sm:$0xff]
          %v1296 = vld [vmem:[#allocation2 + $0x30] sm:$0xff]
          %v1297 = vld [vmem:[#allocation2 + $0x38] sm:$0xff]
          %v1298 = vrot.slane %v1290, 4
          %v1299 = vadd.f32 %v1290, %v1298
          %v1300 = vrot.slane %v1299, 2
          %v1301 = vadd.f32 %v1299, %v1300
          %v1302 = vrot.slane %v1301, 1
          %v1303 = vadd.f32 %v1301, %v1302
          %v1304 = vrot.slane %v1291, 4
          %v1305 = vadd.f32 %v1291, %v1304
          %v1306 = vrot.slane %v1305, 2
          %v1307 = vadd.f32 %v1305, %v1306
          %v1308 = vrot.slane %v1307, 1
          %v1309 = vadd.f32 %v1307, %v1308
          %v1310 = vrot.slane %v1292, 4
          %v1311 = vadd.f32 %v1292, %v1310
          %v1312 = vrot.slane %v1311, 2
          %v1313 = vadd.f32 %v1311, %v1312
          %v1314 = vrot.slane %v1313, 1
          %v1315 = vadd.f32 %v1313, %v1314
          %v1316 = vrot.slane %v1293, 4
          %v1317 = vadd.f32 %v1293, %v1316
          %v1318 = vrot.slane %v1317, 2
          %v1319 = vadd.f32 %v1317, %v1318
          %v1320 = vrot.slane %v1319, 1
          %v1321 = vadd.f32 %v1319, %v1320
          %v1322 = vrot.slane %v1294, 4
          %v1323 = vadd.f32 %v1294, %v1322
          %v1324 = vrot.slane %v1323, 2
          %v1325 = vadd.f32 %v1323, %v1324
          %v1326 = vrot.slane %v1325, 1
          %v1327 = vadd.f32 %v1325, %v1326
          %v1328 = vrot.slane %v1295, 4
          %v1329 = vadd.f32 %v1295, %v1328
          %v1330 = vrot.slane %v1329, 2
          %v1331 = vadd.f32 %v1329, %v1330
          %v1332 = vrot.slane %v1331, 1
          %v1333 = vadd.f32 %v1331, %v1332
          %v1334 = vrot.slane %v1296, 4
          %v1335 = vadd.f32 %v1296, %v1334
          %v1336 = vrot.slane %v1335, 2
          %v1337 = vadd.f32 %v1335, %v1336
          %v1338 = vrot.slane %v1337, 1
          %v1339 = vadd.f32 %v1337, %v1338
          %v1340 = vrot.slane %v1297, 4
          %v1341 = vadd.f32 %v1297, %v1340
          %v1342 = vrot.slane %v1341, 2
          %v1343 = vadd.f32 %v1341, %v1342
          %v1344 = vrot.slane %v1343, 1
          %v1345 = vadd.f32 %v1343, %v1344
          %v1346 = vmul.f32 %v1290, %v1290
          %v1347 = vmul.f32 %v1291, %v1291
          %v1348 = vmul.f32 %v1292, %v1292
          %v1349 = vmul.f32 %v1293, %v1293
          %v1350 = vmul.f32 %v1294, %v1294
          %v1351 = vmul.f32 %v1295, %v1295
          %v1352 = vmul.f32 %v1296, %v1296
          %v1353 = vmul.f32 %v1297, %v1297
          %v1354 = vrot.slane %v1346, 4
          %v1355 = vadd.f32 %v1346, %v1354
          %v1356 = vrot.slane %v1355, 2
          %v1357 = vadd.f32 %v1355, %v1356
          %v1358 = vrot.slane %v1357, 1
          %v1359 = vadd.f32 %v1357, %v1358
          %v1360 = vrot.slane %v1347, 4
          %v1361 = vadd.f32 %v1347, %v1360
          %v1362 = vrot.slane %v1361, 2
          %v1363 = vadd.f32 %v1361, %v1362
          %v1364 = vrot.slane %v1363, 1
          %v1365 = vadd.f32 %v1363, %v1364
          %v1366 = vrot.slane %v1348, 4
          %v1367 = vadd.f32 %v1348, %v1366
          %v1368 = vrot.slane %v1367, 2
          %v1369 = vadd.f32 %v1367, %v1368
          %v1370 = vrot.slane %v1369, 1
          %v1371 = vadd.f32 %v1369, %v1370
          %v1372 = vrot.slane %v1349, 4
          %v1373 = vadd.f32 %v1349, %v1372
          %v1374 = vrot.slane %v1373, 2
          %v1375 = vadd.f32 %v1373, %v1374
          %v1376 = vrot.slane %v1375, 1
          %v1377 = vadd.f32 %v1375, %v1376
          %v1378 = vrot.slane %v1350, 4
          %v1379 = vadd.f32 %v1350, %v1378
          %v1380 = vrot.slane %v1379, 2
          %v1381 = vadd.f32 %v1379, %v1380
          %v1382 = vrot.slane %v1381, 1
          %v1383 = vadd.f32 %v1381, %v1382
          %v1384 = vrot.slane %v1351, 4
          %v1385 = vadd.f32 %v1351, %v1384
          %v1386 = vrot.slane %v1385, 2
          %v1387 = vadd.f32 %v1385, %v1386
          %v1388 = vrot.slane %v1387, 1
          %v1389 = vadd.f32 %v1387, %v1388
          %v1390 = vrot.slane %v1352, 4
          %v1391 = vadd.f32 %v1352, %v1390
          %v1392 = vrot.slane %v1391, 2
          %v1393 = vadd.f32 %v1391, %v1392
          %v1394 = vrot.slane %v1393, 1
          %v1395 = vadd.f32 %v1393, %v1394
          %v1396 = vrot.slane %v1353, 4
          %v1397 = vadd.f32 %v1353, %v1396
          %v1398 = vrot.slane %v1397, 2
          %v1399 = vadd.f32 %v1397, %v1398
          %v1400 = vrot.slane %v1399, 1
          %v1401 = vadd.f32 %v1399, %v1400
          %v1402 = vmul.f32 %v1303, 0.125
          %v1403 = vmul.f32 %v1309, 0.125
          %v1404 = vmul.f32 %v1315, 0.125
          %v1405 = vmul.f32 %v1321, 0.125
          %v1406 = vmul.f32 %v1327, 0.125
          %v1407 = vmul.f32 %v1333, 0.125
          %v1408 = vmul.f32 %v1339, 0.125
          %v1409 = vmul.f32 %v1345, 0.125
          %v1410 = vmul.f32 %v1359, 0.125
          %v1411 = vmul.f32 %v1365, 0.125
          %v1412 = vmul.f32 %v1371, 0.125
          %v1413 = vmul.f32 %v1377, 0.125
          %v1414 = vmul.f32 %v1383, 0.125
          %v1415 = vmul.f32 %v1389, 0.125
          %v1416 = vmul.f32 %v1395, 0.125
          %v1417 = vmul.f32 %v1401, 0.125
          %v1418 = vmul.f32 %v1402, %v1402
          %v1419 = vmul.f32 %v1403, %v1403
          %v1420 = vmul.f32 %v1404, %v1404
          %v1421 = vmul.f32 %v1405, %v1405
          %v1422 = vmul.f32 %v1406, %v1406
          %v1423 = vmul.f32 %v1407, %v1407
          %v1424 = vmul.f32 %v1408, %v1408
          %v1425 = vmul.f32 %v1409, %v1409
          %v1426 = vsub.f32 %v1410, %v1418
          %v1427 = vsub.f32 %v1411, %v1419
          %v1428 = vsub.f32 %v1412, %v1420
          %v1429 = vsub.f32 %v1413, %v1421
          %v1430 = vsub.f32 %v1414, %v1422
          %v1431 = vsub.f32 %v1415, %v1423
          %v1432 = vsub.f32 %v1416, %v1424
          %v1433 = vsub.f32 %v1417, %v1425
          %v1434 = vmax.f32 %v1426, 0.0
          %v1435 = vmax.f32 %v1427, 0.0
          %v1436 = vmax.f32 %v1428, 0.0
          %v1437 = vmax.f32 %v1429, 0.0
          %v1438 = vmax.f32 %v1430, 0.0
          %v1439 = vmax.f32 %v1431, 0.0
          %v1440 = vmax.f32 %v1432, 0.0
          %v1441 = vmax.f32 %v1433, 0.0
          %v1442 = vsub.f32 %v1290, %v1402
          %v1443 = vsub.f32 %v1291, %v1403
          %v1444 = vsub.f32 %v1292, %v1404
          %v1445 = vsub.f32 %v1293, %v1405
          %v1446 = vsub.f32 %v1294, %v1406
          %v1447 = vsub.f32 %v1295, %v1407
          %v1448 = vsub.f32 %v1296, %v1408
          %v1449 = vsub.f32 %v1297, %v1409
          %v1450 = vadd.f32 %v1434, 2e-05
          %v1451 = vadd.f32 %v1435, 2e-05
          %v1452 = vadd.f32 %v1436, 2e-05
          %v1453 = vadd.f32 %v1437, 2e-05
          %v1454 = vadd.f32 %v1438, 2e-05
          %v1455 = vadd.f32 %v1439, 2e-05
          %v1456 = vadd.f32 %v1440, 2e-05
          %v1457 = vadd.f32 %v1441, 2e-05
          %v1458 = vrsqrt.pop %v1450
          %v1459 = vrsqrt.pop %v1451
          %v1460 = vrsqrt.pop %v1452
          %v1461 = vrsqrt.pop %v1453
          %v1462 = vrsqrt.pop %v1454
          %v1463 = vrsqrt.pop %v1455
          %v1464 = vrsqrt.pop %v1456
          %v1465 = vrsqrt.pop %v1457
          %v1466 = vmul.f32 %v1442, %v1458
          %v1467 = vmul.f32 %v1443, %v1459
          %v1468 = vmul.f32 %v1444, %v1460
          %v1469 = vmul.f32 %v1445, %v1461
          %v1470 = vmul.f32 %v1446, %v1462
          %v1471 = vmul.f32 %v1447, %v1463
          %v1472 = vmul.f32 %v1448, %v1464
          %v1473 = vmul.f32 %v1449, %v1465
          %v1474 = vmax.f32 %v1466, 0.0
          %v1475 = vmax.f32 %v1467, 0.0
          %v1476 = vmax.f32 %v1468, 0.0
          %v1477 = vmax.f32 %v1469, 0.0
          %v1478 = vmax.f32 %v1470, 0.0
          %v1479 = vmax.f32 %v1471, 0.0
          %v1480 = vmax.f32 %v1472, 0.0
          %v1481 = vmax.f32 %v1473, 0.0
          %v1482 = vpack.c.bf16 %v1474, %v1474
          %v1483 = vpack.c.bf16 %v1475, %v1475
          %v1484 = vpack.c.bf16 %v1476, %v1476
          %v1485 = vpack.c.bf16 %v1477, %v1477
          %v1486 = vpack.c.bf16 %v1478, %v1478
          %v1487 = vpack.c.bf16 %v1479, %v1479
          %v1488 = vpack.c.bf16 %v1480, %v1480
          %v1489 = vpack.c.bf16 %v1481, %v1481
          %v1490 = vld [vmem:[%s264] sm:$0xf]
          %v1491 = vld [vmem:[%s264 + $0x4] sm:$0xf]
          %v1492 = vld [vmem:[%s264 + $0x8] sm:$0xf]
          %v1493 = vld [vmem:[%s264 + $0xc] sm:$0xf]
          %v1494 = vld [vmem:[%s264 + $0x10] sm:$0xf]
          %v1495 = vld [vmem:[%s264 + $0x14] sm:$0xf]
          %v1496 = vld [vmem:[%s264 + $0x18] sm:$0xf]
          %v1497 = vld [vmem:[%s264 + $0x1c] sm:$0xf]
          %v1498 = vld [vmem:[%s264 + $0x20] sm:$0xf]
          %v1499 = vld [vmem:[%s264 + $0x24] sm:$0xf]
          %v1500 = vld [vmem:[%s264 + $0x28] sm:$0xf]
          %v1501 = vld [vmem:[%s264 + $0x2c] sm:$0xf]
          %v1502 = vld [vmem:[%s264 + $0x30] sm:$0xf]
          %v1503 = vld [vmem:[%s264 + $0x34] sm:$0xf]
          %v1504 = vld [vmem:[%s264 + $0x38] sm:$0xf]
          %v1505 = vld [vmem:[%s264 + $0x3c] sm:$0xf]
          %v1506 = vld [vmem:[%s264 + $0x40] sm:$0xf]
          %v1507 = vld [vmem:[%s264 + $0x44] sm:$0xf]
          %v1508 = vld [vmem:[%s264 + $0x48] sm:$0xf]
          %v1509 = vld [vmem:[%s264 + $0x4c] sm:$0xf]
          %v1510 = vld [vmem:[%s264 + $0x50] sm:$0xf]
          %v1511 = vld [vmem:[%s264 + $0x54] sm:$0xf]
          %v1512 = vld [vmem:[%s264 + $0x58] sm:$0xf]
          %v1513 = vld [vmem:[%s264 + $0x5c] sm:$0xf]
          %v1514 = vld [vmem:[%s264 + $0x60] sm:$0xf]
          %v1515 = vld [vmem:[%s264 + $0x64] sm:$0xf]
          %v1516 = vld [vmem:[%s264 + $0x68] sm:$0xf]
          %v1517 = vld [vmem:[%s264 + $0x6c] sm:$0xf]
          %v1518 = vld [vmem:[%s264 + $0x70] sm:$0xf]
          %v1519 = vld [vmem:[%s264 + $0x74] sm:$0xf]
          %v1520 = vld [vmem:[%s264 + $0x78] sm:$0xf]
          %v1521 = vld [vmem:[%s264 + $0x7c] sm:$0xf]
          %v1522 = vld [vmem:[%s264 + $0x80] sm:$0xf]
          %v1523 = vld [vmem:[%s264 + $0x84] sm:$0xf]
          %v1524 = vld [vmem:[%s264 + $0x88] sm:$0xf]
          %v1525 = vld [vmem:[%s264 + $0x8c] sm:$0xf]
          %v1526 = vld [vmem:[%s264 + $0x90] sm:$0xf]
          %v1527 = vld [vmem:[%s264 + $0x94] sm:$0xf]
          %v1528 = vld [vmem:[%s264 + $0x98] sm:$0xf]
          %v1529 = vld [vmem:[%s264 + $0x9c] sm:$0xf]
          %v1530 = vld [vmem:[%s264 + $0xa0] sm:$0xf]
          %v1531 = vld [vmem:[%s264 + $0xa4] sm:$0xf]
          %v1532 = vld [vmem:[%s264 + $0xa8] sm:$0xf]
          %v1533 = vld [vmem:[%s264 + $0xac] sm:$0xf]
          %v1534 = vld [vmem:[%s264 + $0xb0] sm:$0xf]
          %v1535 = vld [vmem:[%s264 + $0xb4] sm:$0xf]
          %v1536 = vld [vmem:[%s264 + $0xb8] sm:$0xf]
          %v1537 = vld [vmem:[%s264 + $0xbc] sm:$0xf]
          %v1538 = vld [vmem:[%s264 + $0xc0] sm:$0xf]
          %v1539 = vld [vmem:[%s264 + $0xc4] sm:$0xf]
          %v1540 = vld [vmem:[%s264 + $0xc8] sm:$0xf]
          %v1541 = vld [vmem:[%s264 + $0xcc] sm:$0xf]
          %v1542 = vld [vmem:[%s264 + $0xd0] sm:$0xf]
          %v1543 = vld [vmem:[%s264 + $0xd4] sm:$0xf]
          %v1544 = vld [vmem:[%s264 + $0xd8] sm:$0xf]
          %v1545 = vld [vmem:[%s264 + $0xdc] sm:$0xf]
          %v1546 = vld [vmem:[%s264 + $0xe0] sm:$0xf]
          %v1547 = vld [vmem:[%s264 + $0xe4] sm:$0xf]
          %v1548 = vld [vmem:[%s264 + $0xe8] sm:$0xf]
          %v1549 = vld [vmem:[%s264 + $0xec] sm:$0xf]
          %v1550 = vld [vmem:[%s264 + $0xf0] sm:$0xf]
          %v1551 = vld [vmem:[%s264 + $0xf4] sm:$0xf]
          %v1552 = vld [vmem:[%s264 + $0xf8] sm:$0xf]
          %v1553 = vld [vmem:[%s264 + $0xfc] sm:$0xf]
          %v1554 = vld [vmem:[%s264 + $0x100] sm:$0xf]
          %v1555 = vld [vmem:[%s264 + $0x104] sm:$0xf]
          %v1556 = vld [vmem:[%s264 + $0x108] sm:$0xf]
          %v1557 = vld [vmem:[%s264 + $0x10c] sm:$0xf]
          %v1558 = vld [vmem:[%s264 + $0x110] sm:$0xf]
          %v1559 = vld [vmem:[%s264 + $0x114] sm:$0xf]
          %v1560 = vld [vmem:[%s264 + $0x118] sm:$0xf]
          %v1561 = vld [vmem:[%s264 + $0x11c] sm:$0xf]
          %v1562 = vld [vmem:[%s264 + $0x120] sm:$0xf]
          %v1563 = vld [vmem:[%s264 + $0x124] sm:$0xf]
          %v1564 = vld [vmem:[%s264 + $0x128] sm:$0xf]
          %v1565 = vld [vmem:[%s264 + $0x12c] sm:$0xf]
          %v1566 = vld [vmem:[%s264 + $0x130] sm:$0xf]
          %v1567 = vld [vmem:[%s264 + $0x134] sm:$0xf]
          %v1568 = vld [vmem:[%s264 + $0x138] sm:$0xf]
          %v1569 = vld [vmem:[%s264 + $0x13c] sm:$0xf]
          %v1570 = vld [vmem:[%s264 + $0x140] sm:$0xf]
          %v1571 = vld [vmem:[%s264 + $0x144] sm:$0xf]
          %v1572 = vld [vmem:[%s264 + $0x148] sm:$0xf]
          %v1573 = vld [vmem:[%s264 + $0x14c] sm:$0xf]
          %v1574 = vld [vmem:[%s264 + $0x150] sm:$0xf]
          %v1575 = vld [vmem:[%s264 + $0x154] sm:$0xf]
          %v1576 = vld [vmem:[%s264 + $0x158] sm:$0xf]
          %v1577 = vld [vmem:[%s264 + $0x15c] sm:$0xf]
          %v1578 = vld [vmem:[%s264 + $0x160] sm:$0xf]
          %v1579 = vld [vmem:[%s264 + $0x164] sm:$0xf]
          %v1580 = vld [vmem:[%s264 + $0x168] sm:$0xf]
          %v1581 = vld [vmem:[%s264 + $0x16c] sm:$0xf]
          %v1582 = vld [vmem:[%s264 + $0x170] sm:$0xf]
          %v1583 = vld [vmem:[%s264 + $0x174] sm:$0xf]
          %v1584 = vld [vmem:[%s264 + $0x178] sm:$0xf]
          %v1585 = vld [vmem:[%s264 + $0x17c] sm:$0xf]
          %v1586 = vld [vmem:[%s264 + $0x180] sm:$0xf]
          %v1587 = vld [vmem:[%s264 + $0x184] sm:$0xf]
          %v1588 = vld [vmem:[%s264 + $0x188] sm:$0xf]
          %v1589 = vld [vmem:[%s264 + $0x18c] sm:$0xf]
          %v1590 = vld [vmem:[%s264 + $0x190] sm:$0xf]
          %v1591 = vld [vmem:[%s264 + $0x194] sm:$0xf]
          %v1592 = vld [vmem:[%s264 + $0x198] sm:$0xf]
          %v1593 = vld [vmem:[%s264 + $0x19c] sm:$0xf]
          %v1594 = vld [vmem:[%s264 + $0x1a0] sm:$0xf]
          %v1595 = vld [vmem:[%s264 + $0x1a4] sm:$0xf]
          %v1596 = vld [vmem:[%s264 + $0x1a8] sm:$0xf]
          %v1597 = vld [vmem:[%s264 + $0x1ac] sm:$0xf]
          %v1598 = vld [vmem:[%s264 + $0x1b0] sm:$0xf]
          %v1599 = vld [vmem:[%s264 + $0x1b4] sm:$0xf]
          %v1600 = vld [vmem:[%s264 + $0x1b8] sm:$0xf]
          %v1601 = vld [vmem:[%s264 + $0x1bc] sm:$0xf]
          %v1602 = vld [vmem:[%s264 + $0x1c0] sm:$0xf]
          %v1603 = vld [vmem:[%s264 + $0x1c4] sm:$0xf]
          %v1604 = vld [vmem:[%s264 + $0x1c8] sm:$0xf]
          %v1605 = vld [vmem:[%s264 + $0x1cc] sm:$0xf]
          %v1606 = vld [vmem:[%s264 + $0x1d0] sm:$0xf]
          %v1607 = vld [vmem:[%s264 + $0x1d4] sm:$0xf]
          %v1608 = vld [vmem:[%s264 + $0x1d8] sm:$0xf]
          %v1609 = vld [vmem:[%s264 + $0x1dc] sm:$0xf]
          %v1610 = vld [vmem:[%s264 + $0x1e0] sm:$0xf]
          %v1611 = vld [vmem:[%s264 + $0x1e4] sm:$0xf]
          %v1612 = vld [vmem:[%s264 + $0x1e8] sm:$0xf]
          %v1613 = vld [vmem:[%s264 + $0x1ec] sm:$0xf]
          %v1614 = vld [vmem:[%s264 + $0x1f0] sm:$0xf]
          %v1615 = vld [vmem:[%s264 + $0x1f4] sm:$0xf]
          %v1616 = vld [vmem:[%s264 + $0x1f8] sm:$0xf]
          %v1617 = vld [vmem:[%s264 + $0x1fc] sm:$0xf]
          %v1746 = vunpack.c.l.b16 %v1490
          %v1747 = vunpack.c.l.b16 %v1491
          %v1748 = vunpack.c.l.b16 %v1492
          %v1749 = vunpack.c.l.b16 %v1493
          %v1750 = vunpack.c.l.b16 %v1494
          %v1751 = vunpack.c.l.b16 %v1495
          %v1752 = vunpack.c.l.b16 %v1496
          %v1753 = vunpack.c.l.b16 %v1497
          %v1754 = vunpack.c.l.b16 %v1498
          %v1755 = vunpack.c.l.b16 %v1499
          %v1756 = vunpack.c.l.b16 %v1500
          %v1757 = vunpack.c.l.b16 %v1501
          %v1758 = vunpack.c.l.b16 %v1502
          %v1759 = vunpack.c.l.b16 %v1503
          %v1760 = vunpack.c.l.b16 %v1504
          %v1761 = vunpack.c.l.b16 %v1505
          %v1762 = vunpack.c.l.b16 %v1506
          %v1763 = vunpack.c.l.b16 %v1507
          %v1764 = vunpack.c.l.b16 %v1508
          %v1765 = vunpack.c.l.b16 %v1509
          %v1766 = vunpack.c.l.b16 %v1510
          %v1767 = vunpack.c.l.b16 %v1511
          %v1768 = vunpack.c.l.b16 %v1512
          %v1769 = vunpack.c.l.b16 %v1513
          %v1770 = vunpack.c.l.b16 %v1514
          %v1771 = vunpack.c.l.b16 %v1515
          %v1772 = vunpack.c.l.b16 %v1516
          %v1773 = vunpack.c.l.b16 %v1517
          %v1774 = vunpack.c.l.b16 %v1518
          %v1775 = vunpack.c.l.b16 %v1519
          %v1776 = vunpack.c.l.b16 %v1520
          %v1777 = vunpack.c.l.b16 %v1521
          %v1778 = vunpack.c.l.b16 %v1522
          %v1779 = vunpack.c.l.b16 %v1523
          %v1780 = vunpack.c.l.b16 %v1524
          %v1781 = vunpack.c.l.b16 %v1525
          %v1782 = vunpack.c.l.b16 %v1526
          %v1783 = vunpack.c.l.b16 %v1527
          %v1784 = vunpack.c.l.b16 %v1528
          %v1785 = vunpack.c.l.b16 %v1529
          %v1786 = vunpack.c.l.b16 %v1530
          %v1787 = vunpack.c.l.b16 %v1531
          %v1788 = vunpack.c.l.b16 %v1532
          %v1789 = vunpack.c.l.b16 %v1533
          %v1790 = vunpack.c.l.b16 %v1534
          %v1791 = vunpack.c.l.b16 %v1535
          %v1792 = vunpack.c.l.b16 %v1536
          %v1793 = vunpack.c.l.b16 %v1537
          %v1794 = vunpack.c.l.b16 %v1538
          %v1795 = vunpack.c.l.b16 %v1539
          %v1796 = vunpack.c.l.b16 %v1540
          %v1797 = vunpack.c.l.b16 %v1541
          %v1798 = vunpack.c.l.b16 %v1542
          %v1799 = vunpack.c.l.b16 %v1543
          %v1800 = vunpack.c.l.b16 %v1544
          %v1801 = vunpack.c.l.b16 %v1545
          %v1802 = vunpack.c.l.b16 %v1546
          %v1803 = vunpack.c.l.b16 %v1547
          %v1804 = vunpack.c.l.b16 %v1548
          %v1805 = vunpack.c.l.b16 %v1549
          %v1806 = vunpack.c.l.b16 %v1550
          %v1807 = vunpack.c.l.b16 %v1551
          %v1808 = vunpack.c.l.b16 %v1552
          %v1809 = vunpack.c.l.b16 %v1553
          %v1810 = vunpack.c.l.b16 %v1554
          %v1811 = vunpack.c.l.b16 %v1555
          %v1812 = vunpack.c.l.b16 %v1556
          %v1813 = vunpack.c.l.b16 %v1557
          %v1814 = vunpack.c.l.b16 %v1558
          %v1815 = vunpack.c.l.b16 %v1559
          %v1816 = vunpack.c.l.b16 %v1560
          %v1817 = vunpack.c.l.b16 %v1561
          %v1818 = vunpack.c.l.b16 %v1562
          %v1819 = vunpack.c.l.b16 %v1563
          %v1820 = vunpack.c.l.b16 %v1564
          %v1821 = vunpack.c.l.b16 %v1565
          %v1822 = vunpack.c.l.b16 %v1566
          %v1823 = vunpack.c.l.b16 %v1567
          %v1824 = vunpack.c.l.b16 %v1568
          %v1825 = vunpack.c.l.b16 %v1569
          %v1826 = vunpack.c.l.b16 %v1570
          %v1827 = vunpack.c.l.b16 %v1571
          %v1828 = vunpack.c.l.b16 %v1572
          %v1829 = vunpack.c.l.b16 %v1573
          %v1830 = vunpack.c.l.b16 %v1574
          %v1831 = vunpack.c.l.b16 %v1575
          %v1832 = vunpack.c.l.b16 %v1576
          %v1833 = vunpack.c.l.b16 %v1577
          %v1834 = vunpack.c.l.b16 %v1578
          %v1835 = vunpack.c.l.b16 %v1579
          %v1836 = vunpack.c.l.b16 %v1580
          %v1837 = vunpack.c.l.b16 %v1581
          %v1838 = vunpack.c.l.b16 %v1582
          %v1839 = vunpack.c.l.b16 %v1583
          %v1840 = vunpack.c.l.b16 %v1584
          %v1841 = vunpack.c.l.b16 %v1585
          %v1842 = vunpack.c.l.b16 %v1586
          %v1843 = vunpack.c.l.b16 %v1587
          %v1844 = vunpack.c.l.b16 %v1588
          %v1845 = vunpack.c.l.b16 %v1589
          %v1846 = vunpack.c.l.b16 %v1590
          %v1847 = vunpack.c.l.b16 %v1591
          %v1848 = vunpack.c.l.b16 %v1592
          %v1849 = vunpack.c.l.b16 %v1593
          %v1850 = vunpack.c.l.b16 %v1594
          %v1851 = vunpack.c.l.b16 %v1595
          %v1852 = vunpack.c.l.b16 %v1596
          %v1853 = vunpack.c.l.b16 %v1597
          %v1854 = vunpack.c.l.b16 %v1598
          %v1855 = vunpack.c.l.b16 %v1599
          %v1856 = vunpack.c.l.b16 %v1600
          %v1857 = vunpack.c.l.b16 %v1601
          %v1858 = vunpack.c.l.b16 %v1602
          %v1859 = vunpack.c.l.b16 %v1603
          %v1860 = vunpack.c.l.b16 %v1604
          %v1861 = vunpack.c.l.b16 %v1605
          %v1862 = vunpack.c.l.b16 %v1606
          %v1863 = vunpack.c.l.b16 %v1607
          %v1864 = vunpack.c.l.b16 %v1608
          %v1865 = vunpack.c.l.b16 %v1609
          %v1866 = vunpack.c.l.b16 %v1610
          %v1867 = vunpack.c.l.b16 %v1611
          %v1868 = vunpack.c.l.b16 %v1612
          %v1869 = vunpack.c.l.b16 %v1613
          %v1870 = vunpack.c.l.b16 %v1614
          %v1871 = vunpack.c.l.b16 %v1615
          %v1872 = vunpack.c.l.b16 %v1616
          %v1873 = vunpack.c.l.b16 %v1617
          %v1874 = vpack.c.b16 %v1747, %v1746
          %v1875 = vpack.c.b16 %v1749, %v1748
          %v1876 = vpack.c.b16 %v1751, %v1750
          %v1877 = vpack.c.b16 %v1753, %v1752
          %v1878 = vpack.c.b16 %v1755, %v1754
          %v1879 = vpack.c.b16 %v1757, %v1756
          %v1880 = vpack.c.b16 %v1759, %v1758
          %v1881 = vpack.c.b16 %v1761, %v1760
          %v1882 = vpack.c.b16 %v1763, %v1762
          %v1883 = vpack.c.b16 %v1765, %v1764
          %v1884 = vpack.c.b16 %v1767, %v1766
          %v1885 = vpack.c.b16 %v1769, %v1768
          %v1886 = vpack.c.b16 %v1771, %v1770
          %v1887 = vpack.c.b16 %v1773, %v1772
          %v1888 = vpack.c.b16 %v1775, %v1774
          %v1889 = vpack.c.b16 %v1777, %v1776
          %v1890 = vpack.c.b16 %v1779, %v1778
          %v1891 = vpack.c.b16 %v1781, %v1780
          %v1892 = vpack.c.b16 %v1783, %v1782
          %v1893 = vpack.c.b16 %v1785, %v1784
          %v1894 = vpack.c.b16 %v1787, %v1786
          %v1895 = vpack.c.b16 %v1789, %v1788
          %v1896 = vpack.c.b16 %v1791, %v1790
          %v1897 = vpack.c.b16 %v1793, %v1792
          %v1898 = vpack.c.b16 %v1795, %v1794
          %v1899 = vpack.c.b16 %v1797, %v1796
          %v1900 = vpack.c.b16 %v1799, %v1798
          %v1901 = vpack.c.b16 %v1801, %v1800
          %v1902 = vpack.c.b16 %v1803, %v1802
          %v1903 = vpack.c.b16 %v1805, %v1804
          %v1904 = vpack.c.b16 %v1807, %v1806
          %v1905 = vpack.c.b16 %v1809, %v1808
          %v1906 = vpack.c.b16 %v1811, %v1810
          %v1907 = vpack.c.b16 %v1813, %v1812
          %v1908 = vpack.c.b16 %v1815, %v1814
          %v1909 = vpack.c.b16 %v1817, %v1816
          %v1910 = vpack.c.b16 %v1819, %v1818
          %v1911 = vpack.c.b16 %v1821, %v1820
          %v1912 = vpack.c.b16 %v1823, %v1822
          %v1913 = vpack.c.b16 %v1825, %v1824
          %v1914 = vpack.c.b16 %v1827, %v1826
          %v1915 = vpack.c.b16 %v1829, %v1828
          %v1916 = vpack.c.b16 %v1831, %v1830
          %v1917 = vpack.c.b16 %v1833, %v1832
          %v1918 = vpack.c.b16 %v1835, %v1834
          %v1919 = vpack.c.b16 %v1837, %v1836
          %v1920 = vpack.c.b16 %v1839, %v1838
          %v1921 = vpack.c.b16 %v1841, %v1840
          %v1922 = vpack.c.b16 %v1843, %v1842
          %v1923 = vpack.c.b16 %v1845, %v1844
          %v1924 = vpack.c.b16 %v1847, %v1846
          %v1925 = vpack.c.b16 %v1849, %v1848
          %v1926 = vpack.c.b16 %v1851, %v1850
          %v1927 = vpack.c.b16 %v1853, %v1852
          %v1928 = vpack.c.b16 %v1855, %v1854
          %v1929 = vpack.c.b16 %v1857, %v1856
          %v1930 = vpack.c.b16 %v1859, %v1858
          %v1931 = vpack.c.b16 %v1861, %v1860
          %v1932 = vpack.c.b16 %v1863, %v1862
          %v1933 = vpack.c.b16 %v1865, %v1864
          %v1934 = vpack.c.b16 %v1867, %v1866
          %v1935 = vpack.c.b16 %v1869, %v1868
          %v1936 = vpack.c.b16 %v1871, %v1870
          %v1937 = vpack.c.b16 %v1873, %v1872
          %2002 = vmatprep.subr.bf16.mxu0 0
          %2003 = vmatpush1.bf16.msra.mxu0 %v1874
          %2004 = vmatprep.subr.bf16.mxu0 0
          %2005 = vmatpush1.bf16.msra.mxu0 %v1875
          %2006 = vmatprep.subr.bf16.mxu0 0
          %2007 = vmatpush1.bf16.msra.mxu0 %v1876
          %2008 = vmatprep.subr.bf16.mxu0 0
          %2009 = vmatpush1.bf16.msra.mxu0 %v1877
          %2010 = vmatprep.subr.bf16.mxu0 0
          %2011 = vmatpush1.bf16.msra.mxu0 %v1878
          %2012 = vmatprep.subr.bf16.mxu0 0
          %2013 = vmatpush1.bf16.msra.mxu0 %v1879
          %2014 = vmatprep.subr.bf16.mxu0 0
          %2015 = vmatpush1.bf16.msra.mxu0 %v1880
          %2016 = vmatprep.subr.bf16.mxu0 0
          %2017 = vmatpush1.bf16.msra.mxu0 %v1881
          %2018 = vmatprep.subr.bf16.mxu0 0
          %2019 = vmatpush1.bf16.msra.mxu0 %v1882
          %2020 = vmatprep.subr.bf16.mxu0 0
          %2021 = vmatpush1.bf16.msra.mxu0 %v1883
          %2022 = vmatprep.subr.bf16.mxu0 0
          %2023 = vmatpush1.bf16.msra.mxu0 %v1884
          %2024 = vmatprep.subr.bf16.mxu0 0
          %2025 = vmatpush1.bf16.msra.mxu0 %v1885
          %2026 = vmatprep.subr.bf16.mxu0 0
          %2027 = vmatpush1.bf16.msra.mxu0 %v1886
          %2028 = vmatprep.subr.bf16.mxu0 0
          %2029 = vmatpush1.bf16.msra.mxu0 %v1887
          %2030 = vmatprep.subr.bf16.mxu0 0
          %2031 = vmatpush1.bf16.msra.mxu0 %v1888
          %2032 = vmatprep.subr.bf16.mxu0 0
          %2033 = vmatpush1.bf16.msra.mxu0 %v1889
          %2034 = vmatprep.mubr.bf16.mxu0 %v1483
          %2035 = vmatmul.mubr.bf16.gmra.mrb[0].mxu0 %v1482
          %v2036 = vpop.f32.mrb[0].mxu0
          %v2037 = vadd.f32 0.0, %v2036
          %v2038 = vpop.f32.mrb[0].mxu0
          %v2039 = vpop.f32.mrb[0].mxu0
          %v2040 = vpop.f32.mrb[0].mxu0
          %2041 = vdwg.mxu0
          %2042 = vmatprep.subr.bf16.mxu0 0
          %2043 = vmatpush1.bf16.msra.mxu0 %v1890
          %2044 = vmatprep.subr.bf16.mxu0 0
          %2045 = vmatpush1.bf16.msra.mxu0 %v1891
          %2046 = vmatprep.subr.bf16.mxu0 0
          %2047 = vmatpush1.bf16.msra.mxu0 %v1892
          %2048 = vmatprep.subr.bf16.mxu0 0
          %2049 = vmatpush1.bf16.msra.mxu0 %v1893
          %2050 = vmatprep.subr.bf16.mxu0 0
          %2051 = vmatpush1.bf16.msra.mxu0 %v1894
          %2052 = vmatprep.subr.bf16.mxu0 0
          %2053 = vmatpush1.bf16.msra.mxu0 %v1895
          %2054 = vmatprep.subr.bf16.mxu0 0
          %2055 = vmatpush1.bf16.msra.mxu0 %v1896
          %2056 = vmatprep.subr.bf16.mxu0 0
          %2057 = vmatpush1.bf16.msra.mxu0 %v1897
          %2058 = vmatprep.subr.bf16.mxu0 0
          %2059 = vmatpush1.bf16.msra.mxu0 %v1898
          %2060 = vmatprep.subr.bf16.mxu0 0
          %2061 = vmatpush1.bf16.msra.mxu0 %v1899
          %2062 = vmatprep.subr.bf16.mxu0 0
          %2063 = vmatpush1.bf16.msra.mxu0 %v1900
          %2064 = vmatprep.subr.bf16.mxu0 0
          %2065 = vmatpush1.bf16.msra.mxu0 %v1901
          %2066 = vmatprep.subr.bf16.mxu0 0
          %2067 = vmatpush1.bf16.msra.mxu0 %v1902
          %2068 = vmatprep.subr.bf16.mxu0 0
          %2069 = vmatpush1.bf16.msra.mxu0 %v1903
          %2070 = vmatprep.subr.bf16.mxu0 0
          %2071 = vmatpush1.bf16.msra.mxu0 %v1904
          %2072 = vmatprep.subr.bf16.mxu0 0
          %2073 = vmatpush1.bf16.msra.mxu0 %v1905
          %2074 = vmatprep.mubr.bf16.mxu0 %v1485
          %2075 = vmatmul.mubr.bf16.gmra.mrb[0].mxu0 %v1484
          %v2076 = vpop.f32.mrb[0].mxu0
          %v2077 = vadd.f32 %v2037, %v2076
          %v2078 = vpop.f32.mrb[0].mxu0
          %v2079 = vpop.f32.mrb[0].mxu0
          %v2080 = vpop.f32.mrb[0].mxu0
          %2081 = vdwg.mxu0
          %2082 = vmatprep.subr.bf16.mxu0 0
          %2083 = vmatpush1.bf16.msra.mxu0 %v1906
          %2084 = vmatprep.subr.bf16.mxu0 0
          %2085 = vmatpush1.bf16.msra.mxu0 %v1907
          %2086 = vmatprep.subr.bf16.mxu0 0
          %2087 = vmatpush1.bf16.msra.mxu0 %v1908
          %2088 = vmatprep.subr.bf16.mxu0 0
          %2089 = vmatpush1.bf16.msra.mxu0 %v1909
          %2090 = vmatprep.subr.bf16.mxu0 0
          %2091 = vmatpush1.bf16.msra.mxu0 %v1910
          %2092 = vmatprep.subr.bf16.mxu0 0
          %2093 = vmatpush1.bf16.msra.mxu0 %v1911
          %2094 = vmatprep.subr.bf16.mxu0 0
          %2095 = vmatpush1.bf16.msra.mxu0 %v1912
          %2096 = vmatprep.subr.bf16.mxu0 0
          %2097 = vmatpush1.bf16.msra.mxu0 %v1913
          %2098 = vmatprep.subr.bf16.mxu0 0
          %2099 = vmatpush1.bf16.msra.mxu0 %v1914
          %2100 = vmatprep.subr.bf16.mxu0 0
          %2101 = vmatpush1.bf16.msra.mxu0 %v1915
          %2102 = vmatprep.subr.bf16.mxu0 0
          %2103 = vmatpush1.bf16.msra.mxu0 %v1916
          %2104 = vmatprep.subr.bf16.mxu0 0
          %2105 = vmatpush1.bf16.msra.mxu0 %v1917
          %2106 = vmatprep.subr.bf16.mxu0 0
          %2107 = vmatpush1.bf16.msra.mxu0 %v1918
          %2108 = vmatprep.subr.bf16.mxu0 0
          %2109 = vmatpush1.bf16.msra.mxu0 %v1919
          %2110 = vmatprep.subr.bf16.mxu0 0
          %2111 = vmatpush1.bf16.msra.mxu0 %v1920
          %2112 = vmatprep.subr.bf16.mxu0 0
          %2113 = vmatpush1.bf16.msra.mxu0 %v1921
          %2114 = vmatprep.mubr.bf16.mxu0 %v1487
          %2115 = vmatmul.mubr.bf16.gmra.mrb[0].mxu0 %v1486
          %v2116 = vpop.f32.mrb[0].mxu0
          %v2117 = vadd.f32 %v2077, %v2116
          %v2118 = vpop.f32.mrb[0].mxu0
          %v2119 = vpop.f32.mrb[0].mxu0
          %v2120 = vpop.f32.mrb[0].mxu0
          %2121 = vdwg.mxu0
          %2122 = vmatprep.subr.bf16.mxu0 0
          %2123 = vmatpush1.bf16.msra.mxu0 %v1922
          %2124 = vmatprep.subr.bf16.mxu0 0
          %2125 = vmatpush1.bf16.msra.mxu0 %v1923
          %2126 = vmatprep.subr.bf16.mxu0 0
          %2127 = vmatpush1.bf16.msra.mxu0 %v1924
          %2128 = vmatprep.subr.bf16.mxu0 0
          %2129 = vmatpush1.bf16.msra.mxu0 %v1925
          %2130 = vmatprep.subr.bf16.mxu0 0
          %2131 = vmatpush1.bf16.msra.mxu0 %v1926
          %2132 = vmatprep.subr.bf16.mxu0 0
          %2133 = vmatpush1.bf16.msra.mxu0 %v1927
          %2134 = vmatprep.subr.bf16.mxu0 0
          %2135 = vmatpush1.bf16.msra.mxu0 %v1928
          %2136 = vmatprep.subr.bf16.mxu0 0
          %2137 = vmatpush1.bf16.msra.mxu0 %v1929
          %2138 = vmatprep.subr.bf16.mxu0 0
          %2139 = vmatpush1.bf16.msra.mxu0 %v1930
          %2140 = vmatprep.subr.bf16.mxu0 0
          %2141 = vmatpush1.bf16.msra.mxu0 %v1931
          %2142 = vmatprep.subr.bf16.mxu0 0
          %2143 = vmatpush1.bf16.msra.mxu0 %v1932
          %2144 = vmatprep.subr.bf16.mxu0 0
          %2145 = vmatpush1.bf16.msra.mxu0 %v1933
          %2146 = vmatprep.subr.bf16.mxu0 0
          %2147 = vmatpush1.bf16.msra.mxu0 %v1934
          %2148 = vmatprep.subr.bf16.mxu0 0
          %2149 = vmatpush1.bf16.msra.mxu0 %v1935
          %2150 = vmatprep.subr.bf16.mxu0 0
          %2151 = vmatpush1.bf16.msra.mxu0 %v1936
          %2152 = vmatprep.subr.bf16.mxu0 0
          %2153 = vmatpush1.bf16.msra.mxu0 %v1937
          %2154 = vmatprep.mubr.bf16.mxu0 %v1489
          %2155 = vmatmul.mubr.bf16.gmra.mrb[0].mxu0 %v1488
          %v2156 = vpop.f32.mrb[0].mxu0
          %v2157 = vadd.f32 %v2117, %v2156
          %v2158 = vpop.f32.mrb[0].mxu0
          %v2159 = vpop.f32.mrb[0].mxu0
          %v2160 = vpop.f32.mrb[0].mxu0
          %2161 = vdwg.mxu0
          %v2162 = vrot.slane %v2157, 4
          %v2163 = vadd.f32 %v2157, %v2162
          %v2164 = vrot.slane %v2163, 2
          %v2165 = vadd.f32 %v2163, %v2164
          %v2166 = vrot.slane %v2165, 1
          %v2167 = vadd.f32 %v2165, %v2166
          %v2168 = vmul.f32 %v2157, %v2157
          %v2169 = vrot.slane %v2168, 4
          %v2170 = vadd.f32 %v2168, %v2169
          %v2171 = vrot.slane %v2170, 2
          %v2172 = vadd.f32 %v2170, %v2171
          %v2173 = vrot.slane %v2172, 1
          %v2174 = vadd.f32 %v2172, %v2173
          %v2175 = vmul.f32 %v2167, 0.125
          %v2176 = vmul.f32 %v2174, 0.125
          %v2177 = vmul.f32 %v2175, %v2175
          %v2178 = vsub.f32 %v2176, %v2177
          %v2179 = vmax.f32 %v2178, 0.0
          %v2180 = vsub.f32 %v2157, %v2175
          %v2181 = vadd.f32 %v2179, 2e-05
          %v2182 = vrsqrt.pop %v2181
          %v2183 = vmul.f32 %v2180, %v2182
          %p2184 = scmp.eq.s32.totalorder %s26, 0
          // Predicated region
          $region57: #{get_mu_logvar.1} parent=55 // pred_check
            %p2185 = pneg %p2184
          $region58: #{get_mu_logvar.1} parent=55 // pred_check_branch
            %2187 = sbr.rel (%p2185) target = $region60
          $region59: #{get_mu_logvar.1} parent=55 // pred_region
            %v2188 = vmul.f32 %v2183, %v2183
            %2189 = vadd.xlane.f32.xlu0 %v2188
            %v2190 = vpop.xlane.xlu0 %2189
            %v2191 = vmax.f32 %v2190, 1e-24
            %v2192 = vrsqrt.pop %v2191
            %v2193 = vmul.f32 %v2183, %v2192
            %2194 = vst [vmem:[%s309] sm:$0xff] %v2193
          $region60: #{get_mu_logvar.1} parent=55 // pred_fallthru
            _
          %p2195 = scmp.eq.s32.totalorder %s26, 1
          // Predicated region
          $region61: #{get_mu_logvar.1} parent=55 // pred_check
            %p2196 = pneg %p2195
          $region62: #{get_mu_logvar.1} parent=55 // pred_check_branch
            %2198 = sbr.rel (%p2196) target = $region64
          $region63: #{get_mu_logvar.1} parent=55 // pred_region
            %s2199 = sld [smem:[#allocation3]]
            %s2200 = sld [smem:[#allocation3 + $0x1]]
            %v2201 = vstv %s2199
            %v2202 = vmul.f32 %v2201, %v2183
            %v2203 = vstv %s2200
            %v2204 = vadd.f32 %v2202, %v2203
            %v2205 = vmax.f32 %v2204, -13.815511
            %v2206 = vsub.f32 %v2204, -13.815511
            %v2207 = vand.u32 2147483647, %v2206
            %v2208 = vsub.f32 0.0, %v2207
            %v2209 = vmul.f32 %v2208, 1.442695
            %v2210 = vpow.pop %v2209
            %v2211 = vadd.f32 %v2210, 1.0
            %v2212 = vlog2.pop %v2211
            %v2213 = vmul.f32 %v2212, 0.6931472
            %v2214 = vadd.f32 %v2205, %v2213
            %2215 = vst [vmem:[%s309] sm:$0xff] %v2214
          $region64: #{get_mu_logvar.1} parent=55 // pred_fallthru
            _
        $region56: #{get_mu_logvar.1} parent=35 // pred_fallthru
          _
        %p2216 = scmp.lt.s32.totalorder %s26, 1
        %s2217 = scalar_select %p2216, %s26, 1
        %s2218 = smul.addr %s2217, 8
        %s2219 = scalar_lea.vmem %s4, %s2218
        // Predicated region
        $region65: #{get_mu_logvar.1} parent=35 // pred_check
          %p2220 = pneg %p153
        $region66: #{get_mu_logvar.1} parent=35 // pred_check_branch
          %2222 = sbr.rel (%p2220) target = $region68
        $region67: #{get_mu_logvar.1} parent=35 // pred_region
          _
        $region68: #{get_mu_logvar.1} parent=35 // pred_fallthru
          _
      $region36: #{get_mu_logvar.1} parent=5 // pred_fallthru
        _
      %p2223 = scmp.le.s32.totalorder 2, %s17
      // Predicated region
      $region69: #{get_mu_logvar.1} parent=5 // pred_check
        %p2224 = pneg %p2223
      $region70: #{get_mu_logvar.1} parent=5 // pred_check_branch
        %2226 = sbr.rel (%p2224) target = $region72
      $region71: #{get_mu_logvar.1} parent=5 // pred_region
        %s2227 = ssub.s32 %s17, 2
        // Predicated region
        $region73: #{get_mu_logvar.1} parent=71 // pred_check
          %p2228 = pneg %p159
        $region74: #{get_mu_logvar.1} parent=71 // pred_check_branch
          %2230 = sbr.rel (%p2228) target = $region76
        $region75: #{get_mu_logvar.1} parent=71 // pred_region
          %p2231 = scmp.lt.s32.totalorder %s28, 1
          %s2232 = scalar_select %p2231, %s28, 1
          %s2233 = smul.addr %s2232, 8
          %s2234 = scalar_lea.vmem %s4, %s2233
        $region76: #{get_mu_logvar.1} parent=71 // pred_fallthru
          _
      $region72: #{get_mu_logvar.1} parent=5 // pred_fallthru
        _
    $region6: #{get_mu_logvar.1} parent=1 // loop_footer
      %s21 = sadd.s32 1, %s17
    $region7: #{get_mu_logvar.1} parent=1 // loop_footer_branch
      %16 = sbr.rel target = $region3
    $region8: #{get_mu_logvar.1} parent=1 // loop_exit
      _
    %2235 = vsyncpa [#allocation4], 1
    %s2236 = scalar_lea.sflag [#allocation4], 1
    %2237 = vsyncpa %s2236, 1
    %2238 = vsyncpa [#allocation8], 1
    %s2239 = scalar_lea.sflag [#allocation8], 1
    %2240 = vsyncpa %s2239, 1
    %2241 = vsyncpa [#allocation5], 1
    %s2242 = scalar_lea.sflag [#allocation5], 1
    %2243 = vsyncpa %s2242, 1

</llo_original>
